<compile_context>
chip_gen: v7x
topology: tpu7x:2x2x1
jax: 0.10.0
libtpu: 0.0.40
codegen_flags: <defaults>
</compile_context>

<pallas_src>
import jax
import jax.numpy as jnp
from jax.experimental import pallas as pl
from jax.experimental.pallas import tpu as pltpu

# ----------------------------------------------------------------------------
# Model configuration (scaled-down stand-in for the AlexNet/VGG backbone)
# ----------------------------------------------------------------------------
NUM_CLASSES = [10, 5]                    # two classifier columns
C_IN, H_IN, W_IN = 4, 8, 8
C_FEAT = 8
HW = H_IN * W_IN                         # 64 spatial positions
FEAT_DIM = C_FEAT * HW                   # flattened feature size per column (512)
HID = 32                                 # stand-in for the 4096-wide fc6/fc7
NCOL = len(NUM_CLASSES)
NCLS_TOTAL = sum(NUM_CLASSES)            # 15
NPAD = 8                                 # batch padded to a sublane multiple
CONV_N = NCOL * C_FEAT                   # 16 fused conv output channels
FLAT = HW * CONV_N                       # 1024 fused flattened feature width
OUT_LANES = 128                          # lane-dense padded classifier width


# ----------------------------------------------------------------------------
# The single fused kernel: conv head -> in-VMEM flatten -> progressive head
# ----------------------------------------------------------------------------
def _pnn_fused_kernel(p_ref, wconv_ref, bconv_ref, w6_ref, b6_ref,
                      w7_ref, b7_ref, wc_ref, bc_ref, o_ref, feat_ref):
    # (1) Both columns' conv heads as ONE matmul over im2col patches (+bias+ReLU).
    conv = jnp.dot(p_ref[...], wconv_ref[...], preferred_element_type=jnp.float32)
    conv = jnp.maximum(conv + bconv_ref[...], 0.0)            # [(hw, n), 16]

    # (2) NCHW-equivalent flatten, entirely in VMEM: the 8 batch rows of spatial
    #     position hw are the 8-aligned sublane block conv[hw*8:(hw+1)*8]; store
    #     them at lane offset hw*16 of the flattened feature scratch.  The fc6
    #     weight rows were permuted at fuse time to this (hw, col, c) order.
    for hw in range(HW):
        feat_ref[:, hw * CONV_N:(hw + 1) * CONV_N] = conv[hw * NPAD:(hw + 1) * NPAD, :]
    feat = feat_ref[...]                                       # [NPAD, 1024]

    # (3) Progressive head: fc6/fc7 of BOTH columns fused along N; the progressive
    #     connectivity ("column 0 does not see column 1") is encoded as zero
    #     blocks in the fused weights -- cheap at this scale (at real scale these
    #     would be skipped with partial matmuls instead).
    #     NOTE: biases/ReLU are applied once here; with a future K-grid
    #     accumulator they must move into a pl.when(k == last) finalize block.
    h6 = jnp.dot(feat, w6_ref[...], preferred_element_type=jnp.float32)
    h6 = jnp.maximum(h6 + b6_ref[...], 0.0)                    # [NPAD, 2*HID]
    h7 = jnp.dot(h6, w7_ref[...], preferred_element_type=jnp.float32)
    h7 = jnp.maximum(h7 + b7_ref[...], 0.0)                    # [NPAD, 2*HID]

    # (4) Both classifiers fused and zero-padded to a lane-dense 128-wide slab
    #     so the final store is a single unmasked vst.
    out = jnp.dot(h7, wc_ref[...], preferred_element_type=jnp.float32)
    o_ref[...] = out + bc_ref[...]                             # [NPAD, 128]


def pallas_forward(patches, fp):
    spec = pl.BlockSpec(memory_space=pltpu.MemorySpace.VMEM)
    return pl.pallas_call(
        _pnn_fused_kernel,
        out_shape=jax.ShapeDtypeStruct((NPAD, OUT_LANES), jnp.float32),
        in_specs=[spec] * 9,
        out_specs=spec,
        scratch_shapes=[pltpu.VMEM((NPAD, FLAT), jnp.float32)],
    )(patches, fp["wconv"], fp["bconv"], fp["w6"], fp["b6"],
      fp["w7"], fp["b7"], fp["wcls"], fp["bcls"])


# ----------------------------------------------------------------------------
# Parameter construction (deterministic, synthetic, PyTorch-style layout)
# ----------------------------------------------------------------------------
def init_params(key):
    params = []
    for i, ncls in enumerate(NUM_CLASSES):
        ks = jax.random.split(jax.random.fold_in(key, i), 8)
        col = {
            "conv_w": 0.1 * jax.random.normal(ks[0], (C_FEAT, C_IN, 3, 3), jnp.float32),
            "conv_b": 0.1 * jax.random.normal(ks[1], (C_FEAT,), jnp.float32),
            # fc matrices are stored pre-transposed as [K, N] (x @ W convention)
            "fc6_w": 0.05 * jax.random.normal(ks[2], (FEAT_DIM * (i + 1), HID), jnp.float32),
            "fc6_b": 0.05 * jax.random.normal(ks[3], (HID,), jnp.float32),
            "fc7_w": 0.05 * jax.random.normal(ks[4], (HID * (i + 1), HID), jnp.float32),
            "fc7_b": 0.05 * jax.random.normal(ks[5], (HID,), jnp.float32),
            "cls_w": 0.05 * jax.random.normal(ks[6], (HID * (i + 1), ncls), jnp.float32),
            "cls_b": 0.05 * jax.random.normal(ks[7], (ncls,), jnp.float32),
        }
        params.append(col)
    return params


def fuse_params(params):
    """One-time weight fusion / permutation (zero per-forward cost).

    At real scale these would additionally be cast to bfloat16 here (MXU bf16 is
    ~2x f32 and halves weight DMA); kept f32 at toy scale so the f32 reference
    check stays tight.
    """
    p0, p1 = params

    # --- conv: [Co,Ci,3,3] -> [(k, ci), Co], k = ki*3+kj; both Couts fused ------
    def conv_w_to_mat(w):
        return w.transpose(2, 3, 1, 0).reshape(9 * C_IN, C_FEAT)
    wconv = jnp.concatenate([conv_w_to_mat(p0["conv_w"]),
                             conv_w_to_mat(p1["conv_w"])], axis=1)        # [36, 16]
    bconv = jnp.concatenate([p0["conv_b"], p1["conv_b"]]).reshape(1, CONV_N)

    # --- fc6: stacked torch-layout weight with zero block, then one row permute
    #     to the kernel feature order f = hw*16 + col*8 + c --------------------
    w6_stack = jnp.zeros((NCOL * FEAT_DIM, NCOL * HID), jnp.float32)
    w6_stack = w6_stack.at[:FEAT_DIM, :HID].set(p0["fc6_w"])   # col0 sees feat0 only
    w6_stack = w6_stack.at[:, HID:].set(p1["fc6_w"])           # col1 sees feat0+feat1
    hw_i, col_i, c_i = jnp.meshgrid(jnp.arange(HW), jnp.arange(NCOL),
                                    jnp.arange(C_FEAT), indexing="ij")
    # kernel row f=(hw,col,c)  ->  torch stacked row col*512 + c*64 + hw (NCHW flatten)
    perm = (col_i * FEAT_DIM + c_i * HW + hw_i).reshape(-1)
    w6 = w6_stack[perm]                                                    # [1024, 64]
    b6 = jnp.concatenate([p0["fc6_b"], p1["fc6_b"]]).reshape(1, NCOL * HID)

    # --- fc7: block matrix [[B0, B1_top], [0, B1_bot]] -------------------------
    b1w = p1["fc7_w"]
    w7 = jnp.concatenate([
        jnp.concatenate([p0["fc7_w"], b1w[:HID]], axis=1),
        jnp.concatenate([jnp.zeros((HID, HID), jnp.float32), b1w[HID:]], axis=1),
    ], axis=0)                                                             # [64, 64]
    b7 = jnp.concatenate([p0["fc7_b"], p1["fc7_b"]]).reshape(1, NCOL * HID)

    # --- classifiers: block matrix [[C0, C1_top], [0, C1_bot]], zero-padded to a
    #     lane-dense 128-wide output slab --------------------------------------
    c1w = p1["cls_w"]
    wcls_core = jnp.concatenate([
        jnp.concatenate([p0["cls_w"], c1w[:HID]], axis=1),
        jnp.concatenate([jnp.zeros((HID, NUM_CLASSES[0]), jnp.float32), c1w[HID:]], axis=1),
    ], axis=0)                                                             # [64, 15]
    wcls = jnp.zeros((NCOL * HID, OUT_LANES), jnp.float32).at[:, :NCLS_TOTAL].set(wcls_core)
    bcls = jnp.zeros((1, OUT_LANES), jnp.float32).at[:, :NCLS_TOTAL].set(
        jnp.concatenate([p0["cls_b"], p1["cls_b"]]))

    return {"wconv": wconv, "bconv": bconv, "w6": w6, "b6": b6,
            "w7": w7, "b7": b7, "wcls": wcls, "bcls": bcls}


# ----------------------------------------------------------------------------
# Forward pass (mirrors Model.forward; Dropout layers are identity in eval)
# ----------------------------------------------------------------------------
def forward(fused, x):
    n = x.shape[0]
    assert n <= NPAD
    # Pad the batch to a sublane multiple (8) so every matmul / store in the
    # kernel runs on full 8-row sublane tiles instead of 2/8-masked ones.
    xb = jnp.pad(x, ((0, NPAD - n), (0, 0), (0, 0), (0, 0)))
    # One-shot im2col glue (a single XLA fusion under jit).  Rows are ordered
    # (h, w, n) so each spatial position's batch rows are contiguous & 8-aligned
    # inside the kernel.
    xt = jnp.transpose(xb, (2, 3, 0, 1))                       # NCHW -> (H, W, N, C)
    xp = jnp.pad(xt, ((1, 1), (1, 1), (0, 0), (0, 0)))
    cols = [xp[ki:ki + H_IN, kj:kj + W_IN] for ki in range(3) for kj in range(3)]
    patches = jnp.concatenate(cols, axis=-1).reshape(HW * NPAD, 9 * C_IN)
    # TODO(synk): at real backbone resolution move this im2col into the kernel
    # (shifted views of an NHWC VMEM tile) to avoid the 9x patch expansion; kept
    # in the wrapper here because the (H,W,N,C)->(H*W*N, 9C) regroup is not a
    # layout-preserving in-kernel reshape at these tiny tile sizes.

    out = pallas_forward(patches, fused)                       # [NPAD, 128]
    out = out[:n, :NCLS_TOTAL]
    return [out[:, :NUM_CLASSES[0]], out[:, NUM_CLASSES[0]:]]


# ----------------------------------------------------------------------------
# Pure-JAX reference mirroring the original (un-fused) PyTorch structure
# ----------------------------------------------------------------------------
def reference_forward(params, x):
    feats, fc6s, fc7s, outs = [], [], [], []
    for i in range(NCOL):
        p = params[i]
        y = jax.lax.conv_general_dilated(
            x, p["conv_w"], window_strides=(1, 1), padding="SAME",
            dimension_numbers=("NCHW", "OIHW", "NCHW"))
        y = jnp.maximum(y + p["conv_b"].reshape(1, C_FEAT, 1, 1), 0.0)
        feats.append(y.reshape(y.shape[0], -1))                 # NCHW flatten
        h6 = jnp.maximum(jnp.concatenate(feats, 1) @ p["fc6_w"] + p["fc6_b"], 0.0)
        fc6s.append(h6)
        h7 = jnp.maximum(jnp.concatenate(fc6s, 1) @ p["fc7_w"] + p["fc7_b"], 0.0)
        fc7s.append(h7)
        outs.append(jnp.concatenate(fc7s, 1) @ p["cls_w"] + p["cls_b"])
    return outs


if __name__ == "__main__":
    key = jax.random.PRNGKey(0)
    kx, kp = jax.random.split(key)
    x = jax.random.normal(kx, (2, C_IN, H_IN, W_IN), jnp.float32)   # NCHW input
    params = init_params(kp)
    fused = fuse_params(params)          # one-time fusion / permutation of weights

    fwd = jax.jit(forward)
    outs = fwd(fused, x)
    outs = [jax.block_until_ready(o) for o in outs]

    assert outs[0].shape == (2, NUM_CLASSES[0])
    assert outs[1].shape == (2, NUM_CLASSES[1])
    assert all(bool(jnp.all(jnp.isfinite(o))) for o in outs)

    # Reference at HIGHEST matmul precision so the all-f32 kernel path is
    # validated tightly (tolerance tightened 1e-2 -> 1e-4 per review; remaining
    # slack covers MXU f32 pass-structure / summation-order differences).
    with jax.default_matmul_precision("highest"):
        refs = reference_forward(params, x)
    for o, r in zip(outs, refs):
        assert jnp.allclose(o, r, rtol=1e-4, atol=1e-4), "mismatch vs reference"

    # TODO(synk): pretrained torchvision backbone weights / torch.load checkpoint
    # restore have no Pallas equivalent; synthetic deterministic weights are used
    # (a real checkpoint would go through the same fuse_params permutation).
    print("KERNEL_OK")
</pallas_src>

<mosaic_0001>
module attributes {stable_mosaic.version = 11 : i64} {
  func.func @_pnn_fused_kernel(%arg0: memref<512x36xf32, #tpu.memory_space<vmem>>, %arg1: memref<36x16xf32, #tpu.memory_space<vmem>>, %arg2: memref<1x16xf32, #tpu.memory_space<vmem>>, %arg3: memref<1024x64xf32, #tpu.memory_space<vmem>>, %arg4: memref<1x64xf32, #tpu.memory_space<vmem>>, %arg5: memref<64x64xf32, #tpu.memory_space<vmem>>, %arg6: memref<1x64xf32, #tpu.memory_space<vmem>>, %arg7: memref<64x128xf32, #tpu.memory_space<vmem>>, %arg8: memref<1x128xf32, #tpu.memory_space<vmem>>, %arg9: memref<8x128xf32, #tpu.memory_space<vmem>>, %arg10: memref<8x1024xf32, #tpu.memory_space<vmem>>) attributes {dimension_semantics = [], scalar_prefetch = 0 : i64, scratch_operands = 1 : i64, tpu.core_type = #tpu.core_type<tc>} {
    %c0 = arith.constant 0 : index
    %c0_0 = arith.constant 0 : index
    %0 = vector.load %arg0[%c0, %c0_0] : memref<512x36xf32, #tpu.memory_space<vmem>>, vector<512x36xf32>
    %c0_1 = arith.constant 0 : index
    %c0_2 = arith.constant 0 : index
    %1 = vector.load %arg1[%c0_1, %c0_2] : memref<36x16xf32, #tpu.memory_space<vmem>>, vector<36x16xf32>
    %cst = arith.constant dense<0.000000e+00> : vector<512x16xf32>
    %2 = tpu.matmul %0, %1, %cst {dimension_numbers = #tpu.dot_dimension_numbers<[1], [0], [0], [1], [0, 0, 1, 1], [], []>} : vector<512x36xf32>, vector<36x16xf32>, vector<512x16xf32> -> vector<512x16xf32>
    %c0_3 = arith.constant 0 : index
    %c0_4 = arith.constant 0 : index
    %3 = vector.load %arg2[%c0_3, %c0_4] : memref<1x16xf32, #tpu.memory_space<vmem>>, vector<1x16xf32>
    %4 = vector.broadcast %3 : vector<1x16xf32> to vector<512x16xf32>
    %5 = arith.addf %2, %4 : vector<512x16xf32>
    %cst_5 = arith.constant 0.000000e+00 : f32
    %6 = vector.broadcast %cst_5 : f32 to vector<512x16xf32>
    %7 = arith.maximumf %5, %6 : vector<512x16xf32>
    %8 = vector.extract_strided_slice %7 {offsets = [0, 0], sizes = [8, 16], strides = [1, 1]} : vector<512x16xf32> to vector<8x16xf32>
    %c0_6 = arith.constant 0 : index
    %c0_7 = arith.constant 0 : index
    %9 = vector.load %arg10[%c0_6, %c0_7] : memref<8x1024xf32, #tpu.memory_space<vmem>>, vector<8x16xf32>
    tpu.vector_store %arg10[%c0_6, %c0_7], %8 {strides = array<i32>} : memref<8x1024xf32, #tpu.memory_space<vmem>>, vector<8x16xf32>,
    %10 = vector.extract_strided_slice %7 {offsets = [8, 0], sizes = [8, 16], strides = [1, 1]} : vector<512x16xf32> to vector<8x16xf32>
    %c0_8 = arith.constant 0 : index
    %c16 = arith.constant 16 : index
    %11 = vector.load %arg10[%c0_8, %c16] : memref<8x1024xf32, #tpu.memory_space<vmem>>, vector<8x16xf32>
    tpu.vector_store %arg10[%c0_8, %c16], %10 {strides = array<i32>} : memref<8x1024xf32, #tpu.memory_space<vmem>>, vector<8x16xf32>,
    %12 = vector.extract_strided_slice %7 {offsets = [16, 0], sizes = [8, 16], strides = [1, 1]} : vector<512x16xf32> to vector<8x16xf32>
    %c0_9 = arith.constant 0 : index
    %c32 = arith.constant 32 : index
    %13 = vector.load %arg10[%c0_9, %c32] : memref<8x1024xf32, #tpu.memory_space<vmem>>, vector<8x16xf32>
    tpu.vector_store %arg10[%c0_9, %c32], %12 {strides = array<i32>} : memref<8x1024xf32, #tpu.memory_space<vmem>>, vector<8x16xf32>,
    %14 = vector.extract_strided_slice %7 {offsets = [24, 0], sizes = [8, 16], strides = [1, 1]} : vector<512x16xf32> to vector<8x16xf32>
    %c0_10 = arith.constant 0 : index
    %c48 = arith.constant 48 : index
    %15 = vector.load %arg10[%c0_10, %c48] : memref<8x1024xf32, #tpu.memory_space<vmem>>, vector<8x16xf32>
    tpu.vector_store %arg10[%c0_10, %c48], %14 {strides = array<i32>} : memref<8x1024xf32, #tpu.memory_space<vmem>>, vector<8x16xf32>,
    %16 = vector.extract_strided_slice %7 {offsets = [32, 0], sizes = [8, 16], strides = [1, 1]} : vector<512x16xf32> to vector<8x16xf32>
    %c0_11 = arith.constant 0 : index
    %c64 = arith.constant 64 : index
    %17 = vector.load %arg10[%c0_11, %c64] : memref<8x1024xf32, #tpu.memory_space<vmem>>, vector<8x16xf32>
    tpu.vector_store %arg10[%c0_11, %c64], %16 {strides = array<i32>} : memref<8x1024xf32, #tpu.memory_space<vmem>>, vector<8x16xf32>,
    %18 = vector.extract_strided_slice %7 {offsets = [40, 0], sizes = [8, 16], strides = [1, 1]} : vector<512x16xf32> to vector<8x16xf32>
    %c0_12 = arith.constant 0 : index
    %c80 = arith.constant 80 : index
    %19 = vector.load %arg10[%c0_12, %c80] : memref<8x1024xf32, #tpu.memory_space<vmem>>, vector<8x16xf32>
    tpu.vector_store %arg10[%c0_12, %c80], %18 {strides = array<i32>} : memref<8x1024xf32, #tpu.memory_space<vmem>>, vector<8x16xf32>,
    %20 = vector.extract_strided_slice %7 {offsets = [48, 0], sizes = [8, 16], strides = [1, 1]} : vector<512x16xf32> to vector<8x16xf32>
    %c0_13 = arith.constant 0 : index
    %c96 = arith.constant 96 : index
    %21 = vector.load %arg10[%c0_13, %c96] : memref<8x1024xf32, #tpu.memory_space<vmem>>, vector<8x16xf32>
    tpu.vector_store %arg10[%c0_13, %c96], %20 {strides = array<i32>} : memref<8x1024xf32, #tpu.memory_space<vmem>>, vector<8x16xf32>,
    %22 = vector.extract_strided_slice %7 {offsets = [56, 0], sizes = [8, 16], strides = [1, 1]} : vector<512x16xf32> to vector<8x16xf32>
    %c0_14 = arith.constant 0 : index
    %c112 = arith.constant 112 : index
    %23 = vector.load %arg10[%c0_14, %c112] : memref<8x1024xf32, #tpu.memory_space<vmem>>, vector<8x16xf32>
    tpu.vector_store %arg10[%c0_14, %c112], %22 {strides = array<i32>} : memref<8x1024xf32, #tpu.memory_space<vmem>>, vector<8x16xf32>,
    %24 = vector.extract_strided_slice %7 {offsets = [64, 0], sizes = [8, 16], strides = [1, 1]} : vector<512x16xf32> to vector<8x16xf32>
    %c0_15 = arith.constant 0 : index
    %c128 = arith.constant 128 : index
    %25 = vector.load %arg10[%c0_15, %c128] : memref<8x1024xf32, #tpu.memory_space<vmem>>, vector<8x16xf32>
    tpu.vector_store %arg10[%c0_15, %c128], %24 {strides = array<i32>} : memref<8x1024xf32, #tpu.memory_space<vmem>>, vector<8x16xf32>,
    %26 = vector.extract_strided_slice %7 {offsets = [72, 0], sizes = [8, 16], strides = [1, 1]} : vector<512x16xf32> to vector<8x16xf32>
    %c0_16 = arith.constant 0 : index
    %c144 = arith.constant 144 : index
    %27 = vector.load %arg10[%c0_16, %c144] : memref<8x1024xf32, #tpu.memory_space<vmem>>, vector<8x16xf32>
    tpu.vector_store %arg10[%c0_16, %c144], %26 {strides = array<i32>} : memref<8x1024xf32, #tpu.memory_space<vmem>>, vector<8x16xf32>,
    %28 = vector.extract_strided_slice %7 {offsets = [80, 0], sizes = [8, 16], strides = [1, 1]} : vector<512x16xf32> to vector<8x16xf32>
    %c0_17 = arith.constant 0 : index
    %c160 = arith.constant 160 : index
    %29 = vector.load %arg10[%c0_17, %c160] : memref<8x1024xf32, #tpu.memory_space<vmem>>, vector<8x16xf32>
    tpu.vector_store %arg10[%c0_17, %c160], %28 {strides = array<i32>} : memref<8x1024xf32, #tpu.memory_space<vmem>>, vector<8x16xf32>,
    %30 = vector.extract_strided_slice %7 {offsets = [88, 0], sizes = [8, 16], strides = [1, 1]} : vector<512x16xf32> to vector<8x16xf32>
    %c0_18 = arith.constant 0 : index
    %c176 = arith.constant 176 : index
    %31 = vector.load %arg10[%c0_18, %c176] : memref<8x1024xf32, #tpu.memory_space<vmem>>, vector<8x16xf32>
    tpu.vector_store %arg10[%c0_18, %c176], %30 {strides = array<i32>} : memref<8x1024xf32, #tpu.memory_space<vmem>>, vector<8x16xf32>,
    %32 = vector.extract_strided_slice %7 {offsets = [96, 0], sizes = [8, 16], strides = [1, 1]} : vector<512x16xf32> to vector<8x16xf32>
    %c0_19 = arith.constant 0 : index
    %c192 = arith.constant 192 : index
    %33 = vector.load %arg10[%c0_19, %c192] : memref<8x1024xf32, #tpu.memory_space<vmem>>, vector<8x16xf32>
    tpu.vector_store %arg10[%c0_19, %c192], %32 {strides = array<i32>} : memref<8x1024xf32, #tpu.memory_space<vmem>>, vector<8x16xf32>,
    %34 = vector.extract_strided_slice %7 {offsets = [104, 0], sizes = [8, 16], strides = [1, 1]} : vector<512x16xf32> to vector<8x16xf32>
    %c0_20 = arith.constant 0 : index
    %c208 = arith.constant 208 : index
    %35 = vector.load %arg10[%c0_20, %c208] : memref<8x1024xf32, #tpu.memory_space<vmem>>, vector<8x16xf32>
    tpu.vector_store %arg10[%c0_20, %c208], %34 {strides = array<i32>} : memref<8x1024xf32, #tpu.memory_space<vmem>>, vector<8x16xf32>,
    %36 = vector.extract_strided_slice %7 {offsets = [112, 0], sizes = [8, 16], strides = [1, 1]} : vector<512x16xf32> to vector<8x16xf32>
    %c0_21 = arith.constant 0 : index
    %c224 = arith.constant 224 : index
    %37 = vector.load %arg10[%c0_21, %c224] : memref<8x1024xf32, #tpu.memory_space<vmem>>, vector<8x16xf32>
    tpu.vector_store %arg10[%c0_21, %c224], %36 {strides = array<i32>} : memref<8x1024xf32, #tpu.memory_space<vmem>>, vector<8x16xf32>,
    %38 = vector.extract_strided_slice %7 {offsets = [120, 0], sizes = [8, 16], strides = [1, 1]} : vector<512x16xf32> to vector<8x16xf32>
    %c0_22 = arith.constant 0 : index
    %c240 = arith.constant 240 : index
    %39 = vector.load %arg10[%c0_22, %c240] : memref<8x1024xf32, #tpu.memory_space<vmem>>, vector<8x16xf32>
    tpu.vector_store %arg10[%c0_22, %c240], %38 {strides = array<i32>} : memref<8x1024xf32, #tpu.memory_space<vmem>>, vector<8x16xf32>,
    %40 = vector.extract_strided_slice %7 {offsets = [128, 0], sizes = [8, 16], strides = [1, 1]} : vector<512x16xf32> to vector<8x16xf32>
    %c0_23 = arith.constant 0 : index
    %c256 = arith.constant 256 : index
    %41 = vector.load %arg10[%c0_23, %c256] : memref<8x1024xf32, #tpu.memory_space<vmem>>, vector<8x16xf32>
    tpu.vector_store %arg10[%c0_23, %c256], %40 {strides = array<i32>} : memref<8x1024xf32, #tpu.memory_space<vmem>>, vector<8x16xf32>,
    %42 = vector.extract_strided_slice %7 {offsets = [136, 0], sizes = [8, 16], strides = [1, 1]} : vector<512x16xf32> to vector<8x16xf32>
    %c0_24 = arith.constant 0 : index
    %c272 = arith.constant 272 : index
    %43 = vector.load %arg10[%c0_24, %c272] : memref<8x1024xf32, #tpu.memory_space<vmem>>, vector<8x16xf32>
    tpu.vector_store %arg10[%c0_24, %c272], %42 {strides = array<i32>} : memref<8x1024xf32, #tpu.memory_space<vmem>>, vector<8x16xf32>,
    %44 = vector.extract_strided_slice %7 {offsets = [144, 0], sizes = [8, 16], strides = [1, 1]} : vector<512x16xf32> to vector<8x16xf32>
    %c0_25 = arith.constant 0 : index
    %c288 = arith.constant 288 : index
    %45 = vector.load %arg10[%c0_25, %c288] : memref<8x1024xf32, #tpu.memory_space<vmem>>, vector<8x16xf32>
    tpu.vector_store %arg10[%c0_25, %c288], %44 {strides = array<i32>} : memref<8x1024xf32, #tpu.memory_space<vmem>>, vector<8x16xf32>,
    %46 = vector.extract_strided_slice %7 {offsets = [152, 0], sizes = [8, 16], strides = [1, 1]} : vector<512x16xf32> to vector<8x16xf32>
    %c0_26 = arith.constant 0 : index
    %c304 = arith.constant 304 : index
    %47 = vector.load %arg10[%c0_26, %c304] : memref<8x1024xf32, #tpu.memory_space<vmem>>, vector<8x16xf32>
    tpu.vector_store %arg10[%c0_26, %c304], %46 {strides = array<i32>} : memref<8x1024xf32, #tpu.memory_space<vmem>>, vector<8x16xf32>,
    %48 = vector.extract_strided_slice %7 {offsets = [160, 0], sizes = [8, 16], strides = [1, 1]} : vector<512x16xf32> to vector<8x16xf32>
    %c0_27 = arith.constant 0 : index
    %c320 = arith.constant 320 : index
    %49 = vector.load %arg10[%c0_27, %c320] : memref<8x1024xf32, #tpu.memory_space<vmem>>, vector<8x16xf32>
    tpu.vector_store %arg10[%c0_27, %c320], %48 {strides = array<i32>} : memref<8x1024xf32, #tpu.memory_space<vmem>>, vector<8x16xf32>,
    %50 = vector.extract_strided_slice %7 {offsets = [168, 0], sizes = [8, 16], strides = [1, 1]} : vector<512x16xf32> to vector<8x16xf32>
    %c0_28 = arith.constant 0 : index
    %c336 = arith.constant 336 : index
    %51 = vector.load %arg10[%c0_28, %c336] : memref<8x1024xf32, #tpu.memory_space<vmem>>, vector<8x16xf32>
    tpu.vector_store %arg10[%c0_28, %c336], %50 {strides = array<i32>} : memref<8x1024xf32, #tpu.memory_space<vmem>>, vector<8x16xf32>,
    %52 = vector.extract_strided_slice %7 {offsets = [176, 0], sizes = [8, 16], strides = [1, 1]} : vector<512x16xf32> to vector<8x16xf32>
    %c0_29 = arith.constant 0 : index
    %c352 = arith.constant 352 : index
    %53 = vector.load %arg10[%c0_29, %c352] : memref<8x1024xf32, #tpu.memory_space<vmem>>, vector<8x16xf32>
    tpu.vector_store %arg10[%c0_29, %c352], %52 {strides = array<i32>} : memref<8x1024xf32, #tpu.memory_space<vmem>>, vector<8x16xf32>,
    %54 = vector.extract_strided_slice %7 {offsets = [184, 0], sizes = [8, 16], strides = [1, 1]} : vector<512x16xf32> to vector<8x16xf32>
    %c0_30 = arith.constant 0 : index
    %c368 = arith.constant 368 : index
    %55 = vector.load %arg10[%c0_30, %c368] : memref<8x1024xf32, #tpu.memory_space<vmem>>, vector<8x16xf32>
    tpu.vector_store %arg10[%c0_30, %c368], %54 {strides = array<i32>} : memref<8x1024xf32, #tpu.memory_space<vmem>>, vector<8x16xf32>,
    %56 = vector.extract_strided_slice %7 {offsets = [192, 0], sizes = [8, 16], strides = [1, 1]} : vector<512x16xf32> to vector<8x16xf32>
    %c0_31 = arith.constant 0 : index
    %c384 = arith.constant 384 : index
    %57 = vector.load %arg10[%c0_31, %c384] : memref<8x1024xf32, #tpu.memory_space<vmem>>, vector<8x16xf32>
    tpu.vector_store %arg10[%c0_31, %c384], %56 {strides = array<i32>} : memref<8x1024xf32, #tpu.memory_space<vmem>>, vector<8x16xf32>,
    %58 = vector.extract_strided_slice %7 {offsets = [200, 0], sizes = [8, 16], strides = [1, 1]} : vector<512x16xf32> to vector<8x16xf32>
    %c0_32 = arith.constant 0 : index
    %c400 = arith.constant 400 : index
    %59 = vector.load %arg10[%c0_32, %c400] : memref<8x1024xf32, #tpu.memory_space<vmem>>, vector<8x16xf32>
    tpu.vector_store %arg10[%c0_32, %c400], %58 {strides = array<i32>} : memref<8x1024xf32, #tpu.memory_space<vmem>>, vector<8x16xf32>,
    %60 = vector.extract_strided_slice %7 {offsets = [208, 0], sizes = [8, 16], strides = [1, 1]} : vector<512x16xf32> to vector<8x16xf32>
    %c0_33 = arith.constant 0 : index
    %c416 = arith.constant 416 : index
    %61 = vector.load %arg10[%c0_33, %c416] : memref<8x1024xf32, #tpu.memory_space<vmem>>, vector<8x16xf32>
    tpu.vector_store %arg10[%c0_33, %c416], %60 {strides = array<i32>} : memref<8x1024xf32, #tpu.memory_space<vmem>>, vector<8x16xf32>,
    %62 = vector.extract_strided_slice %7 {offsets = [216, 0], sizes = [8, 16], strides = [1, 1]} : vector<512x16xf32> to vector<8x16xf32>
    %c0_34 = arith.constant 0 : index
    %c432 = arith.constant 432 : index
    %63 = vector.load %arg10[%c0_34, %c432] : memref<8x1024xf32, #tpu.memory_space<vmem>>, vector<8x16xf32>
    tpu.vector_store %arg10[%c0_34, %c432], %62 {strides = array<i32>} : memref<8x1024xf32, #tpu.memory_space<vmem>>, vector<8x16xf32>,
    %64 = vector.extract_strided_slice %7 {offsets = [224, 0], sizes = [8, 16], strides = [1, 1]} : vector<512x16xf32> to vector<8x16xf32>
    %c0_35 = arith.constant 0 : index
    %c448 = arith.constant 448 : index
    %65 = vector.load %arg10[%c0_35, %c448] : memref<8x1024xf32, #tpu.memory_space<vmem>>, vector<8x16xf32>
    tpu.vector_store %arg10[%c0_35, %c448], %64 {strides = array<i32>} : memref<8x1024xf32, #tpu.memory_space<vmem>>, vector<8x16xf32>,
    %66 = vector.extract_strided_slice %7 {offsets = [232, 0], sizes = [8, 16], strides = [1, 1]} : vector<512x16xf32> to vector<8x16xf32>
    %c0_36 = arith.constant 0 : index
    %c464 = arith.constant 464 : index
    %67 = vector.load %arg10[%c0_36, %c464] : memref<8x1024xf32, #tpu.memory_space<vmem>>, vector<8x16xf32>
    tpu.vector_store %arg10[%c0_36, %c464], %66 {strides = array<i32>} : memref<8x1024xf32, #tpu.memory_space<vmem>>, vector<8x16xf32>,
    %68 = vector.extract_strided_slice %7 {offsets = [240, 0], sizes = [8, 16], strides = [1, 1]} : vector<512x16xf32> to vector<8x16xf32>
    %c0_37 = arith.constant 0 : index
    %c480 = arith.constant 480 : index
    %69 = vector.load %arg10[%c0_37, %c480] : memref<8x1024xf32, #tpu.memory_space<vmem>>, vector<8x16xf32>
    tpu.vector_store %arg10[%c0_37, %c480], %68 {strides = array<i32>} : memref<8x1024xf32, #tpu.memory_space<vmem>>, vector<8x16xf32>,
    %70 = vector.extract_strided_slice %7 {offsets = [248, 0], sizes = [8, 16], strides = [1, 1]} : vector<512x16xf32> to vector<8x16xf32>
    %c0_38 = arith.constant 0 : index
    %c496 = arith.constant 496 : index
    %71 = vector.load %arg10[%c0_38, %c496] : memref<8x1024xf32, #tpu.memory_space<vmem>>, vector<8x16xf32>
    tpu.vector_store %arg10[%c0_38, %c496], %70 {strides = array<i32>} : memref<8x1024xf32, #tpu.memory_space<vmem>>, vector<8x16xf32>,
    %72 = vector.extract_strided_slice %7 {offsets = [256, 0], sizes = [8, 16], strides = [1, 1]} : vector<512x16xf32> to vector<8x16xf32>
    %c0_39 = arith.constant 0 : index
    %c512 = arith.constant 512 : index
    %73 = vector.load %arg10[%c0_39, %c512] : memref<8x1024xf32, #tpu.memory_space<vmem>>, vector<8x16xf32>
    tpu.vector_store %arg10[%c0_39, %c512], %72 {strides = array<i32>} : memref<8x1024xf32, #tpu.memory_space<vmem>>, vector<8x16xf32>,
    %74 = vector.extract_strided_slice %7 {offsets = [264, 0], sizes = [8, 16], strides = [1, 1]} : vector<512x16xf32> to vector<8x16xf32>
    %c0_40 = arith.constant 0 : index
    %c528 = arith.constant 528 : index
    %75 = vector.load %arg10[%c0_40, %c528] : memref<8x1024xf32, #tpu.memory_space<vmem>>, vector<8x16xf32>
    tpu.vector_store %arg10[%c0_40, %c528], %74 {strides = array<i32>} : memref<8x1024xf32, #tpu.memory_space<vmem>>, vector<8x16xf32>,
    %76 = vector.extract_strided_slice %7 {offsets = [272, 0], sizes = [8, 16], strides = [1, 1]} : vector<512x16xf32> to vector<8x16xf32>
    %c0_41 = arith.constant 0 : index
    %c544 = arith.constant 544 : index
    %77 = vector.load %arg10[%c0_41, %c544] : memref<8x1024xf32, #tpu.memory_space<vmem>>, vector<8x16xf32>
    tpu.vector_store %arg10[%c0_41, %c544], %76 {strides = array<i32>} : memref<8x1024xf32, #tpu.memory_space<vmem>>, vector<8x16xf32>,
    %78 = vector.extract_strided_slice %7 {offsets = [280, 0], sizes = [8, 16], strides = [1, 1]} : vector<512x16xf32> to vector<8x16xf32>
    %c0_42 = arith.constant 0 : index
    %c560 = arith.constant 560 : index
    %79 = vector.load %arg10[%c0_42, %c560] : memref<8x1024xf32, #tpu.memory_space<vmem>>, vector<8x16xf32>
    tpu.vector_store %arg10[%c0_42, %c560], %78 {strides = array<i32>} : memref<8x1024xf32, #tpu.memory_space<vmem>>, vector<8x16xf32>,
    %80 = vector.extract_strided_slice %7 {offsets = [288, 0], sizes = [8, 16], strides = [1, 1]} : vector<512x16xf32> to vector<8x16xf32>
    %c0_43 = arith.constant 0 : index
    %c576 = arith.constant 576 : index
    %81 = vector.load %arg10[%c0_43, %c576] : memref<8x1024xf32, #tpu.memory_space<vmem>>, vector<8x16xf32>
    tpu.vector_store %arg10[%c0_43, %c576], %80 {strides = array<i32>} : memref<8x1024xf32, #tpu.memory_space<vmem>>, vector<8x16xf32>,
    %82 = vector.extract_strided_slice %7 {offsets = [296, 0], sizes = [8, 16], strides = [1, 1]} : vector<512x16xf32> to vector<8x16xf32>
    %c0_44 = arith.constant 0 : index
    %c592 = arith.constant 592 : index
    %83 = vector.load %arg10[%c0_44, %c592] : memref<8x1024xf32, #tpu.memory_space<vmem>>, vector<8x16xf32>
    tpu.vector_store %arg10[%c0_44, %c592], %82 {strides = array<i32>} : memref<8x1024xf32, #tpu.memory_space<vmem>>, vector<8x16xf32>,
    %84 = vector.extract_strided_slice %7 {offsets = [304, 0], sizes = [8, 16], strides = [1, 1]} : vector<512x16xf32> to vector<8x16xf32>
    %c0_45 = arith.constant 0 : index
    %c608 = arith.constant 608 : index
    %85 = vector.load %arg10[%c0_45, %c608] : memref<8x1024xf32, #tpu.memory_space<vmem>>, vector<8x16xf32>
    tpu.vector_store %arg10[%c0_45, %c608], %84 {strides = array<i32>} : memref<8x1024xf32, #tpu.memory_space<vmem>>, vector<8x16xf32>,
    %86 = vector.extract_strided_slice %7 {offsets = [312, 0], sizes = [8, 16], strides = [1, 1]} : vector<512x16xf32> to vector<8x16xf32>
    %c0_46 = arith.constant 0 : index
    %c624 = arith.constant 624 : index
    %87 = vector.load %arg10[%c0_46, %c624] : memref<8x1024xf32, #tpu.memory_space<vmem>>, vector<8x16xf32>
    tpu.vector_store %arg10[%c0_46, %c624], %86 {strides = array<i32>} : memref<8x1024xf32, #tpu.memory_space<vmem>>, vector<8x16xf32>,
    %88 = vector.extract_strided_slice %7 {offsets = [320, 0], sizes = [8, 16], strides = [1, 1]} : vector<512x16xf32> to vector<8x16xf32>
    %c0_47 = arith.constant 0 : index
    %c640 = arith.constant 640 : index
    %89 = vector.load %arg10[%c0_47, %c640] : memref<8x1024xf32, #tpu.memory_space<vmem>>, vector<8x16xf32>
    tpu.vector_store %arg10[%c0_47, %c640], %88 {strides = array<i32>} : memref<8x1024xf32, #tpu.memory_space<vmem>>, vector<8x16xf32>,
    %90 = vector.extract_strided_slice %7 {offsets = [328, 0], sizes = [8, 16], strides = [1, 1]} : vector<512x16xf32> to vector<8x16xf32>
    %c0_48 = arith.constant 0 : index
    %c656 = arith.constant 656 : index
    %91 = vector.load %arg10[%c0_48, %c656] : memref<8x1024xf32, #tpu.memory_space<vmem>>, vector<8x16xf32>
    tpu.vector_store %arg10[%c0_48, %c656], %90 {strides = array<i32>} : memref<8x1024xf32, #tpu.memory_space<vmem>>, vector<8x16xf32>,
    %92 = vector.extract_strided_slice %7 {offsets = [336, 0], sizes = [8, 16], strides = [1, 1]} : vector<512x16xf32> to vector<8x16xf32>
    %c0_49 = arith.constant 0 : index
    %c672 = arith.constant 672 : index
    %93 = vector.load %arg10[%c0_49, %c672] : memref<8x1024xf32, #tpu.memory_space<vmem>>, vector<8x16xf32>
    tpu.vector_store %arg10[%c0_49, %c672], %92 {strides = array<i32>} : memref<8x1024xf32, #tpu.memory_space<vmem>>, vector<8x16xf32>,
    %94 = vector.extract_strided_slice %7 {offsets = [344, 0], sizes = [8, 16], strides = [1, 1]} : vector<512x16xf32> to vector<8x16xf32>
    %c0_50 = arith.constant 0 : index
    %c688 = arith.constant 688 : index
    %95 = vector.load %arg10[%c0_50, %c688] : memref<8x1024xf32, #tpu.memory_space<vmem>>, vector<8x16xf32>
    tpu.vector_store %arg10[%c0_50, %c688], %94 {strides = array<i32>} : memref<8x1024xf32, #tpu.memory_space<vmem>>, vector<8x16xf32>,
    %96 = vector.extract_strided_slice %7 {offsets = [352, 0], sizes = [8, 16], strides = [1, 1]} : vector<512x16xf32> to vector<8x16xf32>
    %c0_51 = arith.constant 0 : index
    %c704 = arith.constant 704 : index
    %97 = vector.load %arg10[%c0_51, %c704] : memref<8x1024xf32, #tpu.memory_space<vmem>>, vector<8x16xf32>
    tpu.vector_store %arg10[%c0_51, %c704], %96 {strides = array<i32>} : memref<8x1024xf32, #tpu.memory_space<vmem>>, vector<8x16xf32>,
    %98 = vector.extract_strided_slice %7 {offsets = [360, 0], sizes = [8, 16], strides = [1, 1]} : vector<512x16xf32> to vector<8x16xf32>
    %c0_52 = arith.constant 0 : index
    %c720 = arith.constant 720 : index
    %99 = vector.load %arg10[%c0_52, %c720] : memref<8x1024xf32, #tpu.memory_space<vmem>>, vector<8x16xf32>
    tpu.vector_store %arg10[%c0_52, %c720], %98 {strides = array<i32>} : memref<8x1024xf32, #tpu.memory_space<vmem>>, vector<8x16xf32>,
    %100 = vector.extract_strided_slice %7 {offsets = [368, 0], sizes = [8, 16], strides = [1, 1]} : vector<512x16xf32> to vector<8x16xf32>
    %c0_53 = arith.constant 0 : index
    %c736 = arith.constant 736 : index
    %101 = vector.load %arg10[%c0_53, %c736] : memref<8x1024xf32, #tpu.memory_space<vmem>>, vector<8x16xf32>
    tpu.vector_store %arg10[%c0_53, %c736], %100 {strides = array<i32>} : memref<8x1024xf32, #tpu.memory_space<vmem>>, vector<8x16xf32>,
    %102 = vector.extract_strided_slice %7 {offsets = [376, 0], sizes = [8, 16], strides = [1, 1]} : vector<512x16xf32> to vector<8x16xf32>
    %c0_54 = arith.constant 0 : index
    %c752 = arith.constant 752 : index
    %103 = vector.load %arg10[%c0_54, %c752] : memref<8x1024xf32, #tpu.memory_space<vmem>>, vector<8x16xf32>
    tpu.vector_store %arg10[%c0_54, %c752], %102 {strides = array<i32>} : memref<8x1024xf32, #tpu.memory_space<vmem>>, vector<8x16xf32>,
    %104 = vector.extract_strided_slice %7 {offsets = [384, 0], sizes = [8, 16], strides = [1, 1]} : vector<512x16xf32> to vector<8x16xf32>
    %c0_55 = arith.constant 0 : index
    %c768 = arith.constant 768 : index
    %105 = vector.load %arg10[%c0_55, %c768] : memref<8x1024xf32, #tpu.memory_space<vmem>>, vector<8x16xf32>
    tpu.vector_store %arg10[%c0_55, %c768], %104 {strides = array<i32>} : memref<8x1024xf32, #tpu.memory_space<vmem>>, vector<8x16xf32>,
    %106 = vector.extract_strided_slice %7 {offsets = [392, 0], sizes = [8, 16], strides = [1, 1]} : vector<512x16xf32> to vector<8x16xf32>
    %c0_56 = arith.constant 0 : index
    %c784 = arith.constant 784 : index
    %107 = vector.load %arg10[%c0_56, %c784] : memref<8x1024xf32, #tpu.memory_space<vmem>>, vector<8x16xf32>
    tpu.vector_store %arg10[%c0_56, %c784], %106 {strides = array<i32>} : memref<8x1024xf32, #tpu.memory_space<vmem>>, vector<8x16xf32>,
    %108 = vector.extract_strided_slice %7 {offsets = [400, 0], sizes = [8, 16], strides = [1, 1]} : vector<512x16xf32> to vector<8x16xf32>
    %c0_57 = arith.constant 0 : index
    %c800 = arith.constant 800 : index
    %109 = vector.load %arg10[%c0_57, %c800] : memref<8x1024xf32, #tpu.memory_space<vmem>>, vector<8x16xf32>
    tpu.vector_store %arg10[%c0_57, %c800], %108 {strides = array<i32>} : memref<8x1024xf32, #tpu.memory_space<vmem>>, vector<8x16xf32>,
    %110 = vector.extract_strided_slice %7 {offsets = [408, 0], sizes = [8, 16], strides = [1, 1]} : vector<512x16xf32> to vector<8x16xf32>
    %c0_58 = arith.constant 0 : index
    %c816 = arith.constant 816 : index
    %111 = vector.load %arg10[%c0_58, %c816] : memref<8x1024xf32, #tpu.memory_space<vmem>>, vector<8x16xf32>
    tpu.vector_store %arg10[%c0_58, %c816], %110 {strides = array<i32>} : memref<8x1024xf32, #tpu.memory_space<vmem>>, vector<8x16xf32>,
    %112 = vector.extract_strided_slice %7 {offsets = [416, 0], sizes = [8, 16], strides = [1, 1]} : vector<512x16xf32> to vector<8x16xf32>
    %c0_59 = arith.constant 0 : index
    %c832 = arith.constant 832 : index
    %113 = vector.load %arg10[%c0_59, %c832] : memref<8x1024xf32, #tpu.memory_space<vmem>>, vector<8x16xf32>
    tpu.vector_store %arg10[%c0_59, %c832], %112 {strides = array<i32>} : memref<8x1024xf32, #tpu.memory_space<vmem>>, vector<8x16xf32>,
    %114 = vector.extract_strided_slice %7 {offsets = [424, 0], sizes = [8, 16], strides = [1, 1]} : vector<512x16xf32> to vector<8x16xf32>
    %c0_60 = arith.constant 0 : index
    %c848 = arith.constant 848 : index
    %115 = vector.load %arg10[%c0_60, %c848] : memref<8x1024xf32, #tpu.memory_space<vmem>>, vector<8x16xf32>
    tpu.vector_store %arg10[%c0_60, %c848], %114 {strides = array<i32>} : memref<8x1024xf32, #tpu.memory_space<vmem>>, vector<8x16xf32>,
    %116 = vector.extract_strided_slice %7 {offsets = [432, 0], sizes = [8, 16], strides = [1, 1]} : vector<512x16xf32> to vector<8x16xf32>
    %c0_61 = arith.constant 0 : index
    %c864 = arith.constant 864 : index
    %117 = vector.load %arg10[%c0_61, %c864] : memref<8x1024xf32, #tpu.memory_space<vmem>>, vector<8x16xf32>
    tpu.vector_store %arg10[%c0_61, %c864], %116 {strides = array<i32>} : memref<8x1024xf32, #tpu.memory_space<vmem>>, vector<8x16xf32>,
    %118 = vector.extract_strided_slice %7 {offsets = [440, 0], sizes = [8, 16], strides = [1, 1]} : vector<512x16xf32> to vector<8x16xf32>
    %c0_62 = arith.constant 0 : index
    %c880 = arith.constant 880 : index
    %119 = vector.load %arg10[%c0_62, %c880] : memref<8x1024xf32, #tpu.memory_space<vmem>>, vector<8x16xf32>
    tpu.vector_store %arg10[%c0_62, %c880], %118 {strides = array<i32>} : memref<8x1024xf32, #tpu.memory_space<vmem>>, vector<8x16xf32>,
    %120 = vector.extract_strided_slice %7 {offsets = [448, 0], sizes = [8, 16], strides = [1, 1]} : vector<512x16xf32> to vector<8x16xf32>
    %c0_63 = arith.constant 0 : index
    %c896 = arith.constant 896 : index
    %121 = vector.load %arg10[%c0_63, %c896] : memref<8x1024xf32, #tpu.memory_space<vmem>>, vector<8x16xf32>
    tpu.vector_store %arg10[%c0_63, %c896], %120 {strides = array<i32>} : memref<8x1024xf32, #tpu.memory_space<vmem>>, vector<8x16xf32>,
    %122 = vector.extract_strided_slice %7 {offsets = [456, 0], sizes = [8, 16], strides = [1, 1]} : vector<512x16xf32> to vector<8x16xf32>
    %c0_64 = arith.constant 0 : index
    %c912 = arith.constant 912 : index
    %123 = vector.load %arg10[%c0_64, %c912] : memref<8x1024xf32, #tpu.memory_space<vmem>>, vector<8x16xf32>
    tpu.vector_store %arg10[%c0_64, %c912], %122 {strides = array<i32>} : memref<8x1024xf32, #tpu.memory_space<vmem>>, vector<8x16xf32>,
    %124 = vector.extract_strided_slice %7 {offsets = [464, 0], sizes = [8, 16], strides = [1, 1]} : vector<512x16xf32> to vector<8x16xf32>
    %c0_65 = arith.constant 0 : index
    %c928 = arith.constant 928 : index
    %125 = vector.load %arg10[%c0_65, %c928] : memref<8x1024xf32, #tpu.memory_space<vmem>>, vector<8x16xf32>
    tpu.vector_store %arg10[%c0_65, %c928], %124 {strides = array<i32>} : memref<8x1024xf32, #tpu.memory_space<vmem>>, vector<8x16xf32>,
    %126 = vector.extract_strided_slice %7 {offsets = [472, 0], sizes = [8, 16], strides = [1, 1]} : vector<512x16xf32> to vector<8x16xf32>
    %c0_66 = arith.constant 0 : index
    %c944 = arith.constant 944 : index
    %127 = vector.load %arg10[%c0_66, %c944] : memref<8x1024xf32, #tpu.memory_space<vmem>>, vector<8x16xf32>
    tpu.vector_store %arg10[%c0_66, %c944], %126 {strides = array<i32>} : memref<8x1024xf32, #tpu.memory_space<vmem>>, vector<8x16xf32>,
    %128 = vector.extract_strided_slice %7 {offsets = [480, 0], sizes = [8, 16], strides = [1, 1]} : vector<512x16xf32> to vector<8x16xf32>
    %c0_67 = arith.constant 0 : index
    %c960 = arith.constant 960 : index
    %129 = vector.load %arg10[%c0_67, %c960] : memref<8x1024xf32, #tpu.memory_space<vmem>>, vector<8x16xf32>
    tpu.vector_store %arg10[%c0_67, %c960], %128 {strides = array<i32>} : memref<8x1024xf32, #tpu.memory_space<vmem>>, vector<8x16xf32>,
    %130 = vector.extract_strided_slice %7 {offsets = [488, 0], sizes = [8, 16], strides = [1, 1]} : vector<512x16xf32> to vector<8x16xf32>
    %c0_68 = arith.constant 0 : index
    %c976 = arith.constant 976 : index
    %131 = vector.load %arg10[%c0_68, %c976] : memref<8x1024xf32, #tpu.memory_space<vmem>>, vector<8x16xf32>
    tpu.vector_store %arg10[%c0_68, %c976], %130 {strides = array<i32>} : memref<8x1024xf32, #tpu.memory_space<vmem>>, vector<8x16xf32>,
    %132 = vector.extract_strided_slice %7 {offsets = [496, 0], sizes = [8, 16], strides = [1, 1]} : vector<512x16xf32> to vector<8x16xf32>
    %c0_69 = arith.constant 0 : index
    %c992 = arith.constant 992 : index
    %133 = vector.load %arg10[%c0_69, %c992] : memref<8x1024xf32, #tpu.memory_space<vmem>>, vector<8x16xf32>
    tpu.vector_store %arg10[%c0_69, %c992], %132 {strides = array<i32>} : memref<8x1024xf32, #tpu.memory_space<vmem>>, vector<8x16xf32>,
    %134 = vector.extract_strided_slice %7 {offsets = [504, 0], sizes = [8, 16], strides = [1, 1]} : vector<512x16xf32> to vector<8x16xf32>
    %c0_70 = arith.constant 0 : index
    %c1008 = arith.constant 1008 : index
    %135 = vector.load %arg10[%c0_70, %c1008] : memref<8x1024xf32, #tpu.memory_space<vmem>>, vector<8x16xf32>
    tpu.vector_store %arg10[%c0_70, %c1008], %134 {strides = array<i32>} : memref<8x1024xf32, #tpu.memory_space<vmem>>, vector<8x16xf32>,
    %c0_71 = arith.constant 0 : index
    %c0_72 = arith.constant 0 : index
    %136 = vector.load %arg10[%c0_71, %c0_72] : memref<8x1024xf32, #tpu.memory_space<vmem>>, vector<8x1024xf32>
    %c0_73 = arith.constant 0 : index
    %c0_74 = arith.constant 0 : index
    %137 = vector.load %arg3[%c0_73, %c0_74] : memref<1024x64xf32, #tpu.memory_space<vmem>>, vector<1024x64xf32>
    %cst_75 = arith.constant dense<0.000000e+00> : vector<8x64xf32>
    %138 = tpu.matmul %136, %137, %cst_75 {dimension_numbers = #tpu.dot_dimension_numbers<[1], [0], [0], [1], [0, 0, 1, 1], [], []>} : vector<8x1024xf32>, vector<1024x64xf32>, vector<8x64xf32> -> vector<8x64xf32>
    %c0_76 = arith.constant 0 : index
    %c0_77 = arith.constant 0 : index
    %139 = vector.load %arg4[%c0_76, %c0_77] : memref<1x64xf32, #tpu.memory_space<vmem>>, vector<1x64xf32>
    %140 = vector.broadcast %139 : vector<1x64xf32> to vector<8x64xf32>
    %141 = arith.addf %138, %140 : vector<8x64xf32>
    %cst_78 = arith.constant 0.000000e+00 : f32
    %142 = vector.broadcast %cst_78 : f32 to vector<8x64xf32>
    %143 = arith.maximumf %141, %142 : vector<8x64xf32>
    %c0_79 = arith.constant 0 : index
    %c0_80 = arith.constant 0 : index
    %144 = vector.load %arg5[%c0_79, %c0_80] : memref<64x64xf32, #tpu.memory_space<vmem>>, vector<64x64xf32>
    %cst_81 = arith.constant dense<0.000000e+00> : vector<8x64xf32>
    %145 = tpu.matmul %143, %144, %cst_81 {dimension_numbers = #tpu.dot_dimension_numbers<[1], [0], [0], [1], [0, 0, 1, 1], [], []>} : vector<8x64xf32>, vector<64x64xf32>, vector<8x64xf32> -> vector<8x64xf32>
    %c0_82 = arith.constant 0 : index
    %c0_83 = arith.constant 0 : index
    %146 = vector.load %arg6[%c0_82, %c0_83] : memref<1x64xf32, #tpu.memory_space<vmem>>, vector<1x64xf32>
    %147 = vector.broadcast %146 : vector<1x64xf32> to vector<8x64xf32>
    %148 = arith.addf %145, %147 : vector<8x64xf32>
    %cst_84 = arith.constant 0.000000e+00 : f32
    %149 = vector.broadcast %cst_84 : f32 to vector<8x64xf32>
    %150 = arith.maximumf %148, %149 : vector<8x64xf32>
    %c0_85 = arith.constant 0 : index
    %c0_86 = arith.constant 0 : index
    %151 = vector.load %arg7[%c0_85, %c0_86] : memref<64x128xf32, #tpu.memory_space<vmem>>, vector<64x128xf32>
    %cst_87 = arith.constant dense<0.000000e+00> : vector<8x128xf32>
    %152 = tpu.matmul %150, %151, %cst_87 {dimension_numbers = #tpu.dot_dimension_numbers<[1], [0], [0], [1], [0, 0, 1, 1], [], []>} : vector<8x64xf32>, vector<64x128xf32>, vector<8x128xf32> -> vector<8x128xf32>
    %c0_88 = arith.constant 0 : index
    %c0_89 = arith.constant 0 : index
    %153 = vector.load %arg8[%c0_88, %c0_89] : memref<1x128xf32, #tpu.memory_space<vmem>>, vector<1x128xf32>
    %154 = vector.broadcast %153 : vector<1x128xf32> to vector<8x128xf32>
    %155 = arith.addf %152, %154 : vector<8x128xf32>
    %c0_90 = arith.constant 0 : index
    %c0_91 = arith.constant 0 : index
    %156 = vector.load %arg9[%c0_90, %c0_91] : memref<8x128xf32, #tpu.memory_space<vmem>>, vector<8x128xf32>
    tpu.vector_store %arg9[%c0_90, %c0_91], %155 {strides = array<i32>} : memref<8x128xf32, #tpu.memory_space<vmem>>, vector<8x128xf32>,
    return
  }
}

</mosaic_0001>

<llo_original>
// kernel: forward.1
$region0: #{forward.1}
  #allocation0 [shape = 'u32[]', space=smem, size = 0x4, offset = 0x4, fixed_abs, tag = 'smem constant byte address 0x4 - core index']
  #allocation1 [shape = 'u32[144,128]{1,0:T(1,128)}', space=vmem, size = 0x12000, scoped, tag = 'internal scratch']
  #allocation2 [shape = 'f32[8,1024]{1,0:T(8,128)}', space=vmem, size = 0x8000, scoped, tag = 'scratch operand']
  %s0 = inlined_call_operand.vmem [shape: f32[512,36], index: 0, kind: input, shape index: {}]
  %s1 = inlined_call_operand.vmem [shape: f32[36,16], index: 1, kind: input, shape index: {}]
  %s2 = inlined_call_operand.vmem [shape: f32[1,16], index: 2, kind: input, shape index: {}]
  %s3 = inlined_call_operand.vmem [shape: f32[1024,64], index: 3, kind: input, shape index: {}]
  %s4 = inlined_call_operand.vmem [shape: f32[1,64], index: 4, kind: input, shape index: {}]
  %s5 = inlined_call_operand.vmem [shape: f32[64,64], index: 5, kind: input, shape index: {}]
  %s6 = inlined_call_operand.vmem [shape: f32[1,64], index: 6, kind: input, shape index: {}]
  %s7 = inlined_call_operand.vmem [shape: f32[64,128], index: 7, kind: input, shape index: {}]
  %s8 = inlined_call_operand.vmem [shape: f32[1,128], index: 8, kind: input, shape index: {}]
  %s9 = inlined_call_operand.vmem [shape: f32[8,128], index: 9, kind: output, shape index: {}]
  %s10 = sld [smem:[#allocation0]]
  $region46: #{forward.1} parent=0
    _
  %s12 = ssub.s32 1, %s10
  %s13 = scalar_select 0, %s12, %s10
  // Predicated region
  $region2: #{forward.1} parent=0 // pred_check
    _
  $region3: #{forward.1} parent=0 // pred_check_branch
    %15 = sbr.rel (0) target = $region5
  $region4: #{forward.1} parent=0 // pred_region
    _
  $region5: #{forward.1} parent=0 // pred_fallthru
    _
  // Predicated region
  $region6: #{forward.1} parent=0 // pred_check
    _
  $region7: #{forward.1} parent=0 // pred_check_branch
    %17 = sbr.rel (0) target = $region9
  $region8: #{forward.1} parent=0 // pred_region
    _
  $region9: #{forward.1} parent=0 // pred_fallthru
    _
  // Predicated region
  $region10: #{forward.1} parent=0 // pred_check
    _
  $region11: #{forward.1} parent=0 // pred_check_branch
    %19 = sbr.rel (0) target = $region13
  $region12: #{forward.1} parent=0 // pred_region
    _
  $region13: #{forward.1} parent=0 // pred_fallthru
    _
  // Predicated region
  $region14: #{forward.1} parent=0 // pred_check
    _
  $region15: #{forward.1} parent=0 // pred_check_branch
    %21 = sbr.rel (0) target = $region17
  $region16: #{forward.1} parent=0 // pred_region
    _
  $region17: #{forward.1} parent=0 // pred_fallthru
    _
  // Predicated region
  $region18: #{forward.1} parent=0 // pred_check
    _
  $region19: #{forward.1} parent=0 // pred_check_branch
    %23 = sbr.rel (0) target = $region21
  $region20: #{forward.1} parent=0 // pred_region
    _
  $region21: #{forward.1} parent=0 // pred_fallthru
    _
  // Predicated region
  $region22: #{forward.1} parent=0 // pred_check
    _
  $region23: #{forward.1} parent=0 // pred_check_branch
    %25 = sbr.rel (0) target = $region25
  $region24: #{forward.1} parent=0 // pred_region
    _
  $region25: #{forward.1} parent=0 // pred_fallthru
    _
  // Predicated region
  $region26: #{forward.1} parent=0 // pred_check
    _
  $region27: #{forward.1} parent=0 // pred_check_branch
    %27 = sbr.rel (0) target = $region29
  $region28: #{forward.1} parent=0 // pred_region
    _
  $region29: #{forward.1} parent=0 // pred_fallthru
    _
  // Predicated region
  $region30: #{forward.1} parent=0 // pred_check
    _
  $region31: #{forward.1} parent=0 // pred_check_branch
    %29 = sbr.rel (0) target = $region33
  $region32: #{forward.1} parent=0 // pred_region
    _
  $region33: #{forward.1} parent=0 // pred_fallthru
    _
  // Predicated region
  $region34: #{forward.1} parent=0 // pred_check
    _
  $region35: #{forward.1} parent=0 // pred_check_branch
    %31 = sbr.rel (0) target = $region37
  $region36: #{forward.1} parent=0 // pred_region
    _
  $region37: #{forward.1} parent=0 // pred_fallthru
    _
  %v32 = vld [vmem:[%s0] sm:$0xff]
  %v33 = vld [vmem:[%s0 + $0x8] sm:$0xff]
  %v34 = vld [vmem:[%s0 + $0x10] sm:$0xff]
  %v35 = vld [vmem:[%s0 + $0x18] sm:$0xff]
  %v36 = vld [vmem:[%s0 + $0x20] sm:$0xff]
  %v37 = vld [vmem:[%s0 + $0x28] sm:$0xff]
  %v38 = vld [vmem:[%s0 + $0x30] sm:$0xff]
  %v39 = vld [vmem:[%s0 + $0x38] sm:$0xff]
  %v40 = vld [vmem:[%s0 + $0x40] sm:$0xff]
  %v41 = vld [vmem:[%s0 + $0x48] sm:$0xff]
  %v42 = vld [vmem:[%s0 + $0x50] sm:$0xff]
  %v43 = vld [vmem:[%s0 + $0x58] sm:$0xff]
  %v44 = vld [vmem:[%s0 + $0x60] sm:$0xff]
  %v45 = vld [vmem:[%s0 + $0x68] sm:$0xff]
  %v46 = vld [vmem:[%s0 + $0x70] sm:$0xff]
  %v47 = vld [vmem:[%s0 + $0x78] sm:$0xff]
  %v48 = vld [vmem:[%s0 + $0x80] sm:$0xff]
  %v49 = vld [vmem:[%s0 + $0x88] sm:$0xff]
  %v50 = vld [vmem:[%s0 + $0x90] sm:$0xff]
  %v51 = vld [vmem:[%s0 + $0x98] sm:$0xff]
  %v52 = vld [vmem:[%s0 + $0xa0] sm:$0xff]
  %v53 = vld [vmem:[%s0 + $0xa8] sm:$0xff]
  %v54 = vld [vmem:[%s0 + $0xb0] sm:$0xff]
  %v55 = vld [vmem:[%s0 + $0xb8] sm:$0xff]
  %v56 = vld [vmem:[%s0 + $0xc0] sm:$0xff]
  %v57 = vld [vmem:[%s0 + $0xc8] sm:$0xff]
  %v58 = vld [vmem:[%s0 + $0xd0] sm:$0xff]
  %v59 = vld [vmem:[%s0 + $0xd8] sm:$0xff]
  %v60 = vld [vmem:[%s0 + $0xe0] sm:$0xff]
  %v61 = vld [vmem:[%s0 + $0xe8] sm:$0xff]
  %v62 = vld [vmem:[%s0 + $0xf0] sm:$0xff]
  %v63 = vld [vmem:[%s0 + $0xf8] sm:$0xff]
  %v64 = vld [vmem:[%s0 + $0x100] sm:$0xff]
  %v65 = vld [vmem:[%s0 + $0x108] sm:$0xff]
  %v66 = vld [vmem:[%s0 + $0x110] sm:$0xff]
  %v67 = vld [vmem:[%s0 + $0x118] sm:$0xff]
  %v68 = vld [vmem:[%s0 + $0x120] sm:$0xff]
  %v69 = vld [vmem:[%s0 + $0x128] sm:$0xff]
  %v70 = vld [vmem:[%s0 + $0x130] sm:$0xff]
  %v71 = vld [vmem:[%s0 + $0x138] sm:$0xff]
  %v72 = vld [vmem:[%s0 + $0x140] sm:$0xff]
  %v73 = vld [vmem:[%s0 + $0x148] sm:$0xff]
  %v74 = vld [vmem:[%s0 + $0x150] sm:$0xff]
  %v75 = vld [vmem:[%s0 + $0x158] sm:$0xff]
  %v76 = vld [vmem:[%s0 + $0x160] sm:$0xff]
  %v77 = vld [vmem:[%s0 + $0x168] sm:$0xff]
  %v78 = vld [vmem:[%s0 + $0x170] sm:$0xff]
  %v79 = vld [vmem:[%s0 + $0x178] sm:$0xff]
  %v80 = vld [vmem:[%s0 + $0x180] sm:$0xff]
  %v81 = vld [vmem:[%s0 + $0x188] sm:$0xff]
  %v82 = vld [vmem:[%s0 + $0x190] sm:$0xff]
  %v83 = vld [vmem:[%s0 + $0x198] sm:$0xff]
  %v84 = vld [vmem:[%s0 + $0x1a0] sm:$0xff]
  %v85 = vld [vmem:[%s0 + $0x1a8] sm:$0xff]
  %v86 = vld [vmem:[%s0 + $0x1b0] sm:$0xff]
  %v87 = vld [vmem:[%s0 + $0x1b8] sm:$0xff]
  %v88 = vld [vmem:[%s0 + $0x1c0] sm:$0xff]
  %v89 = vld [vmem:[%s0 + $0x1c8] sm:$0xff]
  %v90 = vld [vmem:[%s0 + $0x1d0] sm:$0xff]
  %v91 = vld [vmem:[%s0 + $0x1d8] sm:$0xff]
  %v92 = vld [vmem:[%s0 + $0x1e0] sm:$0xff]
  %v93 = vld [vmem:[%s0 + $0x1e8] sm:$0xff]
  %v94 = vld [vmem:[%s0 + $0x1f0] sm:$0xff]
  %v95 = vld [vmem:[%s0 + $0x1f8] sm:$0xff]
  %v96 = vld [vmem:[%s1] sm:$0xff]
  %v97 = vld [vmem:[%s1 + $0x8] sm:$0xff]
  %v98 = vld [vmem:[%s1 + $0x10] sm:$0xff]
  %v99 = vld [vmem:[%s1 + $0x18] sm:$0xff]
  %v100 = vld [vmem:[%s1 + $0x20] sm:$0xf]
  %v101 = vld [vmem:[%s2] sm:$0x1]
  %v103 = vlaneseq
  %v104 = vshrl.u32 %v103, 7
  %v105 = vsub.s32 0, %v104
  %v106 = vrot.slane %v101, %v105
  %vm108 = vcmask 293888
  %v110 = vsel %vm108, %v32, 0
  %v113 = vsel %vm108, %v33, 0
  %v116 = vsel %vm108, %v34, 0
  %v119 = vsel %vm108, %v35, 0
  %v122 = vsel %vm108, %v36, 0
  %v125 = vsel %vm108, %v37, 0
  %v128 = vsel %vm108, %v38, 0
  %v131 = vsel %vm108, %v39, 0
  %v134 = vsel %vm108, %v40, 0
  %v137 = vsel %vm108, %v41, 0
  %v140 = vsel %vm108, %v42, 0
  %v143 = vsel %vm108, %v43, 0
  %v146 = vsel %vm108, %v44, 0
  %v149 = vsel %vm108, %v45, 0
  %v152 = vsel %vm108, %v46, 0
  %v155 = vsel %vm108, %v47, 0
  %v158 = vsel %vm108, %v48, 0
  %v161 = vsel %vm108, %v49, 0
  %v164 = vsel %vm108, %v50, 0
  %v167 = vsel %vm108, %v51, 0
  %v170 = vsel %vm108, %v52, 0
  %v173 = vsel %vm108, %v53, 0
  %v176 = vsel %vm108, %v54, 0
  %v179 = vsel %vm108, %v55, 0
  %v182 = vsel %vm108, %v56, 0
  %v185 = vsel %vm108, %v57, 0
  %v188 = vsel %vm108, %v58, 0
  %v191 = vsel %vm108, %v59, 0
  %v194 = vsel %vm108, %v60, 0
  %v197 = vsel %vm108, %v61, 0
  %v200 = vsel %vm108, %v62, 0
  %v203 = vsel %vm108, %v63, 0
  %v206 = vsel %vm108, %v64, 0
  %v209 = vsel %vm108, %v65, 0
  %v212 = vsel %vm108, %v66, 0
  %v215 = vsel %vm108, %v67, 0
  %v218 = vsel %vm108, %v68, 0
  %v221 = vsel %vm108, %v69, 0
  %v224 = vsel %vm108, %v70, 0
  %v227 = vsel %vm108, %v71, 0
  %v230 = vsel %vm108, %v72, 0
  %v233 = vsel %vm108, %v73, 0
  %v236 = vsel %vm108, %v74, 0
  %v239 = vsel %vm108, %v75, 0
  %v242 = vsel %vm108, %v76, 0
  %v245 = vsel %vm108, %v77, 0
  %v248 = vsel %vm108, %v78, 0
  %v251 = vsel %vm108, %v79, 0
  %v254 = vsel %vm108, %v80, 0
  %v257 = vsel %vm108, %v81, 0
  %v260 = vsel %vm108, %v82, 0
  %v263 = vsel %vm108, %v83, 0
  %v266 = vsel %vm108, %v84, 0
  %v269 = vsel %vm108, %v85, 0
  %v272 = vsel %vm108, %v86, 0
  %v275 = vsel %vm108, %v87, 0
  %v278 = vsel %vm108, %v88, 0
  %v281 = vsel %vm108, %v89, 0
  %v284 = vsel %vm108, %v90, 0
  %v287 = vsel %vm108, %v91, 0
  %v290 = vsel %vm108, %v92, 0
  %v293 = vsel %vm108, %v93, 0
  %v296 = vsel %vm108, %v94, 0
  %v299 = vsel %vm108, %v95, 0
  %vm301 = vcmask 1043456
  %v303 = vsel %vm301, %v100, 0
  %305 = vmatprep.subr.mxu0 0.0
  %306 = vmatpush1.msra.mxu0 %v96
  %307 = vmatprep.subr.mxu0 0.0
  %308 = vmatpush1.msra.mxu0 %v97
  %309 = vmatprep.subr.mxu0 0.0
  %310 = vmatpush1.msra.mxu0 %v98
  %311 = vmatprep.subr.mxu0 0.0
  %312 = vmatpush1.msra.mxu0 %v99
  %313 = vmatprep.subr.mxu0 0.0
  %314 = vmatpush1.msra.mxu0 %v303
  %315 = vmatprep.subr.mxu0 0.0
  %316 = vmatpush1.msra.mxu0 0.0
  %317 = vmatprep.subr.mxu0 0.0
  %318 = vmatpush1.msra.mxu0 0.0
  %319 = vmatprep.subr.mxu0 0.0
  %320 = vmatpush1.msra.mxu0 0.0
  %321 = vmatprep.subr.mxu0 0.0
  %322 = vmatpush1.msra.mxu0 0.0
  %323 = vmatprep.subr.mxu0 0.0
  %324 = vmatpush1.msra.mxu0 0.0
  %325 = vmatprep.subr.mxu0 0.0
  %326 = vmatpush1.msra.mxu0 0.0
  %327 = vmatprep.subr.mxu0 0.0
  %328 = vmatpush1.msra.mxu0 0.0
  %329 = vmatprep.subr.mxu0 0.0
  %330 = vmatpush1.msra.mxu0 0.0
  %331 = vmatprep.subr.mxu0 0.0
  %332 = vmatpush1.msra.mxu0 0.0
  %333 = vmatprep.subr.mxu0 0.0
  %334 = vmatpush1.msra.mxu0 0.0
  %335 = vmatprep.subr.mxu0 0.0
  %336 = vmatpush1.msra.mxu0 0.0
  %337 = vmatprep.subr.mxu0 0.0
  %338 = vmatpush1.msra.mxu0 0.0
  %339 = vmatprep.subr.mxu0 0.0
  %340 = vmatpush1.msra.mxu0 0.0
  %341 = vmatprep.subr.mxu0 0.0
  %342 = vmatpush1.msra.mxu0 0.0
  %343 = vmatprep.subr.mxu0 0.0
  %344 = vmatpush1.msra.mxu0 0.0
  %345 = vmatprep.subr.mxu0 0.0
  %346 = vmatpush1.msra.mxu0 0.0
  %347 = vmatprep.subr.mxu0 0.0
  %348 = vmatpush1.msra.mxu0 0.0
  %349 = vmatprep.subr.mxu0 0.0
  %350 = vmatpush1.msra.mxu0 0.0
  %351 = vmatprep.subr.mxu0 0.0
  %352 = vmatpush1.msra.mxu0 0.0
  %353 = vmatprep.subr.mxu0 0.0
  %354 = vmatpush1.msra.mxu0 0.0
  %355 = vmatprep.subr.mxu0 0.0
  %356 = vmatpush1.msra.mxu0 0.0
  %357 = vmatprep.subr.mxu0 0.0
  %358 = vmatpush1.msra.mxu0 0.0
  %359 = vmatprep.subr.mxu0 0.0
  %360 = vmatpush1.msra.mxu0 0.0
  %361 = vmatprep.subr.mxu0 0.0
  %362 = vmatpush1.msra.mxu0 0.0
  %363 = vmatprep.subr.mxu0 0.0
  %364 = vmatpush1.msra.mxu0 0.0
  %365 = vmatprep.subr.mxu0 0.0
  %366 = vmatpush1.msra.mxu0 0.0
  %367 = vmatprep.subr.mxu0 0.0
  %368 = vmatpush1.msra.mxu0 0.0
  %369 = vmatprep.mubr.f32.mxu0 0.0
  %370 = vmatmul.mubr.f32.gmra.mrb[0].mxu0 %v110
  %v371 = vpop.f32.mrb[0].mxu0
  %v372 = vadd.f32 %v106, %v371
  %v373 = vpop.f32.mrb[0].mxu0
  %374 = vmatprep.mubr.f32.mxu0 0.0
  %375 = vmatmul.mubr.f32.gmra.mrb[0].mxu0 %v113
  %v376 = vpop.f32.mrb[0].mxu0
  %v377 = vadd.f32 %v106, %v376
  %v378 = vpop.f32.mrb[0].mxu0
  %379 = vmatprep.mubr.f32.mxu0 0.0
  %380 = vmatmul.mubr.f32.gmra.mrb[0].mxu0 %v116
  %v381 = vpop.f32.mrb[0].mxu0
  %v382 = vadd.f32 %v106, %v381
  %v383 = vpop.f32.mrb[0].mxu0
  %384 = vmatprep.mubr.f32.mxu0 0.0
  %385 = vmatmul.mubr.f32.gmra.mrb[0].mxu0 %v119
  %v386 = vpop.f32.mrb[0].mxu0
  %v387 = vadd.f32 %v106, %v386
  %v388 = vpop.f32.mrb[0].mxu0
  %389 = vmatprep.mubr.f32.mxu0 0.0
  %390 = vmatmul.mubr.f32.gmra.mrb[0].mxu0 %v122
  %v391 = vpop.f32.mrb[0].mxu0
  %v392 = vadd.f32 %v106, %v391
  %v393 = vpop.f32.mrb[0].mxu0
  %394 = vmatprep.mubr.f32.mxu0 0.0
  %395 = vmatmul.mubr.f32.gmra.mrb[0].mxu0 %v125
  %v396 = vpop.f32.mrb[0].mxu0
  %v397 = vadd.f32 %v106, %v396
  %v398 = vpop.f32.mrb[0].mxu0
  %399 = vmatprep.mubr.f32.mxu0 0.0
  %400 = vmatmul.mubr.f32.gmra.mrb[0].mxu0 %v128
  %v401 = vpop.f32.mrb[0].mxu0
  %v402 = vadd.f32 %v106, %v401
  %v403 = vpop.f32.mrb[0].mxu0
  %404 = vmatprep.mubr.f32.mxu0 0.0
  %405 = vmatmul.mubr.f32.gmra.mrb[0].mxu0 %v131
  %v406 = vpop.f32.mrb[0].mxu0
  %v407 = vadd.f32 %v106, %v406
  %v408 = vpop.f32.mrb[0].mxu0
  %409 = vmatprep.mubr.f32.mxu0 0.0
  %410 = vmatmul.mubr.f32.gmra.mrb[0].mxu0 %v134
  %v411 = vpop.f32.mrb[0].mxu0
  %v412 = vadd.f32 %v106, %v411
  %v413 = vpop.f32.mrb[0].mxu0
  %414 = vmatprep.mubr.f32.mxu0 0.0
  %415 = vmatmul.mubr.f32.gmra.mrb[0].mxu0 %v137
  %v416 = vpop.f32.mrb[0].mxu0
  %v417 = vadd.f32 %v106, %v416
  %v418 = vpop.f32.mrb[0].mxu0
  %419 = vmatprep.mubr.f32.mxu0 0.0
  %420 = vmatmul.mubr.f32.gmra.mrb[0].mxu0 %v140
  %v421 = vpop.f32.mrb[0].mxu0
  %v422 = vadd.f32 %v106, %v421
  %v423 = vpop.f32.mrb[0].mxu0
  %424 = vmatprep.mubr.f32.mxu0 0.0
  %425 = vmatmul.mubr.f32.gmra.mrb[0].mxu0 %v143
  %v426 = vpop.f32.mrb[0].mxu0
  %v427 = vadd.f32 %v106, %v426
  %v428 = vpop.f32.mrb[0].mxu0
  %429 = vmatprep.mubr.f32.mxu0 0.0
  %430 = vmatmul.mubr.f32.gmra.mrb[0].mxu0 %v146
  %v431 = vpop.f32.mrb[0].mxu0
  %v432 = vadd.f32 %v106, %v431
  %v433 = vpop.f32.mrb[0].mxu0
  %434 = vmatprep.mubr.f32.mxu0 0.0
  %435 = vmatmul.mubr.f32.gmra.mrb[0].mxu0 %v149
  %v436 = vpop.f32.mrb[0].mxu0
  %v437 = vadd.f32 %v106, %v436
  %v438 = vpop.f32.mrb[0].mxu0
  %439 = vmatprep.mubr.f32.mxu0 0.0
  %440 = vmatmul.mubr.f32.gmra.mrb[0].mxu0 %v152
  %v441 = vpop.f32.mrb[0].mxu0
  %v442 = vadd.f32 %v106, %v441
  %v443 = vpop.f32.mrb[0].mxu0
  %444 = vmatprep.mubr.f32.mxu0 0.0
  %445 = vmatmul.mubr.f32.gmra.mrb[0].mxu0 %v155
  %v446 = vpop.f32.mrb[0].mxu0
  %v447 = vadd.f32 %v106, %v446
  %v448 = vpop.f32.mrb[0].mxu0
  %449 = vmatprep.mubr.f32.mxu0 0.0
  %450 = vmatmul.mubr.f32.gmra.mrb[0].mxu0 %v158
  %v451 = vpop.f32.mrb[0].mxu0
  %v452 = vadd.f32 %v106, %v451
  %v453 = vpop.f32.mrb[0].mxu0
  %454 = vmatprep.mubr.f32.mxu0 0.0
  %455 = vmatmul.mubr.f32.gmra.mrb[0].mxu0 %v161
  %v456 = vpop.f32.mrb[0].mxu0
  %v457 = vadd.f32 %v106, %v456
  %v458 = vpop.f32.mrb[0].mxu0
  %459 = vmatprep.mubr.f32.mxu0 0.0
  %460 = vmatmul.mubr.f32.gmra.mrb[0].mxu0 %v164
  %v461 = vpop.f32.mrb[0].mxu0
  %v462 = vadd.f32 %v106, %v461
  %v463 = vpop.f32.mrb[0].mxu0
  %464 = vmatprep.mubr.f32.mxu0 0.0
  %465 = vmatmul.mubr.f32.gmra.mrb[0].mxu0 %v167
  %v466 = vpop.f32.mrb[0].mxu0
  %v467 = vadd.f32 %v106, %v466
  %v468 = vpop.f32.mrb[0].mxu0
  %469 = vmatprep.mubr.f32.mxu0 0.0
  %470 = vmatmul.mubr.f32.gmra.mrb[0].mxu0 %v170
  %v471 = vpop.f32.mrb[0].mxu0
  %v472 = vadd.f32 %v106, %v471
  %v473 = vpop.f32.mrb[0].mxu0
  %474 = vmatprep.mubr.f32.mxu0 0.0
  %475 = vmatmul.mubr.f32.gmra.mrb[0].mxu0 %v173
  %v476 = vpop.f32.mrb[0].mxu0
  %v477 = vadd.f32 %v106, %v476
  %v478 = vpop.f32.mrb[0].mxu0
  %479 = vmatprep.mubr.f32.mxu0 0.0
  %480 = vmatmul.mubr.f32.gmra.mrb[0].mxu0 %v176
  %v481 = vpop.f32.mrb[0].mxu0
  %v482 = vadd.f32 %v106, %v481
  %v483 = vpop.f32.mrb[0].mxu0
  %484 = vmatprep.mubr.f32.mxu0 0.0
  %485 = vmatmul.mubr.f32.gmra.mrb[0].mxu0 %v179
  %v486 = vpop.f32.mrb[0].mxu0
  %v487 = vadd.f32 %v106, %v486
  %v488 = vpop.f32.mrb[0].mxu0
  %489 = vmatprep.mubr.f32.mxu0 0.0
  %490 = vmatmul.mubr.f32.gmra.mrb[0].mxu0 %v182
  %v491 = vpop.f32.mrb[0].mxu0
  %v492 = vadd.f32 %v106, %v491
  %v493 = vpop.f32.mrb[0].mxu0
  %494 = vmatprep.mubr.f32.mxu0 0.0
  %495 = vmatmul.mubr.f32.gmra.mrb[0].mxu0 %v185
  %v496 = vpop.f32.mrb[0].mxu0
  %v497 = vadd.f32 %v106, %v496
  %v498 = vpop.f32.mrb[0].mxu0
  %499 = vmatprep.mubr.f32.mxu0 0.0
  %500 = vmatmul.mubr.f32.gmra.mrb[0].mxu0 %v188
  %v501 = vpop.f32.mrb[0].mxu0
  %v502 = vadd.f32 %v106, %v501
  %v503 = vpop.f32.mrb[0].mxu0
  %504 = vmatprep.mubr.f32.mxu0 0.0
  %505 = vmatmul.mubr.f32.gmra.mrb[0].mxu0 %v191
  %v506 = vpop.f32.mrb[0].mxu0
  %v507 = vadd.f32 %v106, %v506
  %v508 = vpop.f32.mrb[0].mxu0
  %509 = vmatprep.mubr.f32.mxu0 0.0
  %510 = vmatmul.mubr.f32.gmra.mrb[0].mxu0 %v194
  %v511 = vpop.f32.mrb[0].mxu0
  %v512 = vadd.f32 %v106, %v511
  %v513 = vpop.f32.mrb[0].mxu0
  %514 = vmatprep.mubr.f32.mxu0 0.0
  %515 = vmatmul.mubr.f32.gmra.mrb[0].mxu0 %v197
  %v516 = vpop.f32.mrb[0].mxu0
  %v517 = vadd.f32 %v106, %v516
  %v518 = vpop.f32.mrb[0].mxu0
  %519 = vmatprep.mubr.f32.mxu0 0.0
  %520 = vmatmul.mubr.f32.gmra.mrb[0].mxu0 %v200
  %v521 = vpop.f32.mrb[0].mxu0
  %v522 = vadd.f32 %v106, %v521
  %v523 = vpop.f32.mrb[0].mxu0
  %524 = vmatprep.mubr.f32.mxu0 0.0
  %525 = vmatmul.mubr.f32.gmra.mrb[0].mxu0 %v203
  %v526 = vpop.f32.mrb[0].mxu0
  %v527 = vadd.f32 %v106, %v526
  %v528 = vpop.f32.mrb[0].mxu0
  %529 = vmatprep.mubr.f32.mxu0 0.0
  %530 = vmatmul.mubr.f32.gmra.mrb[0].mxu0 %v206
  %v531 = vpop.f32.mrb[0].mxu0
  %v532 = vadd.f32 %v106, %v531
  %v533 = vpop.f32.mrb[0].mxu0
  %534 = vmatprep.mubr.f32.mxu0 0.0
  %535 = vmatmul.mubr.f32.gmra.mrb[0].mxu0 %v209
  %v536 = vpop.f32.mrb[0].mxu0
  %v537 = vadd.f32 %v106, %v536
  %v538 = vpop.f32.mrb[0].mxu0
  %539 = vmatprep.mubr.f32.mxu0 0.0
  %540 = vmatmul.mubr.f32.gmra.mrb[0].mxu0 %v212
  %v541 = vpop.f32.mrb[0].mxu0
  %v542 = vadd.f32 %v106, %v541
  %v543 = vpop.f32.mrb[0].mxu0
  %544 = vmatprep.mubr.f32.mxu0 0.0
  %545 = vmatmul.mubr.f32.gmra.mrb[0].mxu0 %v215
  %v546 = vpop.f32.mrb[0].mxu0
  %v547 = vadd.f32 %v106, %v546
  %v548 = vpop.f32.mrb[0].mxu0
  %549 = vmatprep.mubr.f32.mxu0 0.0
  %550 = vmatmul.mubr.f32.gmra.mrb[0].mxu0 %v218
  %v551 = vpop.f32.mrb[0].mxu0
  %v552 = vadd.f32 %v106, %v551
  %v553 = vpop.f32.mrb[0].mxu0
  %554 = vmatprep.mubr.f32.mxu0 0.0
  %555 = vmatmul.mubr.f32.gmra.mrb[0].mxu0 %v221
  %v556 = vpop.f32.mrb[0].mxu0
  %v557 = vadd.f32 %v106, %v556
  %v558 = vpop.f32.mrb[0].mxu0
  %559 = vmatprep.mubr.f32.mxu0 0.0
  %560 = vmatmul.mubr.f32.gmra.mrb[0].mxu0 %v224
  %v561 = vpop.f32.mrb[0].mxu0
  %v562 = vadd.f32 %v106, %v561
  %v563 = vpop.f32.mrb[0].mxu0
  %564 = vmatprep.mubr.f32.mxu0 0.0
  %565 = vmatmul.mubr.f32.gmra.mrb[0].mxu0 %v227
  %v566 = vpop.f32.mrb[0].mxu0
  %v567 = vadd.f32 %v106, %v566
  %v568 = vpop.f32.mrb[0].mxu0
  %569 = vmatprep.mubr.f32.mxu0 0.0
  %570 = vmatmul.mubr.f32.gmra.mrb[0].mxu0 %v230
  %v571 = vpop.f32.mrb[0].mxu0
  %v572 = vadd.f32 %v106, %v571
  %v573 = vpop.f32.mrb[0].mxu0
  %574 = vmatprep.mubr.f32.mxu0 0.0
  %575 = vmatmul.mubr.f32.gmra.mrb[0].mxu0 %v233
  %v576 = vpop.f32.mrb[0].mxu0
  %v577 = vadd.f32 %v106, %v576
  %v578 = vpop.f32.mrb[0].mxu0
  %579 = vmatprep.mubr.f32.mxu0 0.0
  %580 = vmatmul.mubr.f32.gmra.mrb[0].mxu0 %v236
  %v581 = vpop.f32.mrb[0].mxu0
  %v582 = vadd.f32 %v106, %v581
  %v583 = vpop.f32.mrb[0].mxu0
  %584 = vmatprep.mubr.f32.mxu0 0.0
  %585 = vmatmul.mubr.f32.gmra.mrb[0].mxu0 %v239
  %v586 = vpop.f32.mrb[0].mxu0
  %v587 = vadd.f32 %v106, %v586
  %v588 = vpop.f32.mrb[0].mxu0
  %589 = vmatprep.mubr.f32.mxu0 0.0
  %590 = vmatmul.mubr.f32.gmra.mrb[0].mxu0 %v242
  %v591 = vpop.f32.mrb[0].mxu0
  %v592 = vadd.f32 %v106, %v591
  %v593 = vpop.f32.mrb[0].mxu0
  %594 = vmatprep.mubr.f32.mxu0 0.0
  %595 = vmatmul.mubr.f32.gmra.mrb[0].mxu0 %v245
  %v596 = vpop.f32.mrb[0].mxu0
  %v597 = vadd.f32 %v106, %v596
  %v598 = vpop.f32.mrb[0].mxu0
  %599 = vmatprep.mubr.f32.mxu0 0.0
  %600 = vmatmul.mubr.f32.gmra.mrb[0].mxu0 %v248
  %v601 = vpop.f32.mrb[0].mxu0
  %v602 = vadd.f32 %v106, %v601
  %v603 = vpop.f32.mrb[0].mxu0
  %604 = vmatprep.mubr.f32.mxu0 0.0
  %605 = vmatmul.mubr.f32.gmra.mrb[0].mxu0 %v251
  %v606 = vpop.f32.mrb[0].mxu0
  %v607 = vadd.f32 %v106, %v606
  %v608 = vpop.f32.mrb[0].mxu0
  %609 = vmatprep.mubr.f32.mxu0 0.0
  %610 = vmatmul.mubr.f32.gmra.mrb[0].mxu0 %v254
  %v611 = vpop.f32.mrb[0].mxu0
  %v612 = vadd.f32 %v106, %v611
  %v613 = vpop.f32.mrb[0].mxu0
  %614 = vmatprep.mubr.f32.mxu0 0.0
  %615 = vmatmul.mubr.f32.gmra.mrb[0].mxu0 %v257
  %v616 = vpop.f32.mrb[0].mxu0
  %v617 = vadd.f32 %v106, %v616
  %v618 = vpop.f32.mrb[0].mxu0
  %619 = vmatprep.mubr.f32.mxu0 0.0
  %620 = vmatmul.mubr.f32.gmra.mrb[0].mxu0 %v260
  %v621 = vpop.f32.mrb[0].mxu0
  %v622 = vadd.f32 %v106, %v621
  %v623 = vpop.f32.mrb[0].mxu0
  %624 = vmatprep.mubr.f32.mxu0 0.0
  %625 = vmatmul.mubr.f32.gmra.mrb[0].mxu0 %v263
  %v626 = vpop.f32.mrb[0].mxu0
  %v627 = vadd.f32 %v106, %v626
  %v628 = vpop.f32.mrb[0].mxu0
  %629 = vmatprep.mubr.f32.mxu0 0.0
  %630 = vmatmul.mubr.f32.gmra.mrb[0].mxu0 %v266
  %v631 = vpop.f32.mrb[0].mxu0
  %v632 = vadd.f32 %v106, %v631
  %v633 = vpop.f32.mrb[0].mxu0
  %634 = vmatprep.mubr.f32.mxu0 0.0
  %635 = vmatmul.mubr.f32.gmra.mrb[0].mxu0 %v269
  %v636 = vpop.f32.mrb[0].mxu0
  %v637 = vadd.f32 %v106, %v636
  %v638 = vpop.f32.mrb[0].mxu0
  %639 = vmatprep.mubr.f32.mxu0 0.0
  %640 = vmatmul.mubr.f32.gmra.mrb[0].mxu0 %v272
  %v641 = vpop.f32.mrb[0].mxu0
  %v642 = vadd.f32 %v106, %v641
  %v643 = vpop.f32.mrb[0].mxu0
  %644 = vmatprep.mubr.f32.mxu0 0.0
  %645 = vmatmul.mubr.f32.gmra.mrb[0].mxu0 %v275
  %v646 = vpop.f32.mrb[0].mxu0
  %v647 = vadd.f32 %v106, %v646
  %v648 = vpop.f32.mrb[0].mxu0
  %649 = vmatprep.mubr.f32.mxu0 0.0
  %650 = vmatmul.mubr.f32.gmra.mrb[0].mxu0 %v278
  %v651 = vpop.f32.mrb[0].mxu0
  %v652 = vadd.f32 %v106, %v651
  %v653 = vpop.f32.mrb[0].mxu0
  %654 = vmatprep.mubr.f32.mxu0 0.0
  %655 = vmatmul.mubr.f32.gmra.mrb[0].mxu0 %v281
  %v656 = vpop.f32.mrb[0].mxu0
  %v657 = vadd.f32 %v106, %v656
  %v658 = vpop.f32.mrb[0].mxu0
  %659 = vmatprep.mubr.f32.mxu0 0.0
  %660 = vmatmul.mubr.f32.gmra.mrb[0].mxu0 %v284
  %v661 = vpop.f32.mrb[0].mxu0
  %v662 = vadd.f32 %v106, %v661
  %v663 = vpop.f32.mrb[0].mxu0
  %664 = vmatprep.mubr.f32.mxu0 0.0
  %665 = vmatmul.mubr.f32.gmra.mrb[0].mxu0 %v287
  %v666 = vpop.f32.mrb[0].mxu0
  %v667 = vadd.f32 %v106, %v666
  %v668 = vpop.f32.mrb[0].mxu0
  %669 = vmatprep.mubr.f32.mxu0 0.0
  %670 = vmatmul.mubr.f32.gmra.mrb[0].mxu0 %v290
  %v671 = vpop.f32.mrb[0].mxu0
  %v672 = vadd.f32 %v106, %v671
  %v673 = vpop.f32.mrb[0].mxu0
  %674 = vmatprep.mubr.f32.mxu0 0.0
  %675 = vmatmul.mubr.f32.gmra.mrb[0].mxu0 %v293
  %v676 = vpop.f32.mrb[0].mxu0
  %v677 = vadd.f32 %v106, %v676
  %v678 = vpop.f32.mrb[0].mxu0
  %679 = vmatprep.mubr.f32.mxu0 0.0
  %680 = vmatmul.mubr.f32.gmra.mrb[0].mxu0 %v296
  %v681 = vpop.f32.mrb[0].mxu0
  %v682 = vadd.f32 %v106, %v681
  %v683 = vpop.f32.mrb[0].mxu0
  %684 = vmatprep.mubr.f32.mxu0 0.0
  %685 = vmatmul.mubr.f32.gmra.mrb[0].mxu0 %v299
  %v686 = vpop.f32.mrb[0].mxu0
  %v687 = vadd.f32 %v106, %v686
  %v688 = vpop.f32.mrb[0].mxu0
  %689 = vdwg.mxu0
  %v690 = vmax.f32 %v372, 0.0
  %v691 = vmax.f32 %v377, 0.0
  %v692 = vmax.f32 %v382, 0.0
  %v693 = vmax.f32 %v387, 0.0
  %v694 = vmax.f32 %v392, 0.0
  %v695 = vmax.f32 %v397, 0.0
  %v696 = vmax.f32 %v402, 0.0
  %v697 = vmax.f32 %v407, 0.0
  %v698 = vmax.f32 %v412, 0.0
  %v699 = vmax.f32 %v417, 0.0
  %v700 = vmax.f32 %v422, 0.0
  %v701 = vmax.f32 %v427, 0.0
  %v702 = vmax.f32 %v432, 0.0
  %v703 = vmax.f32 %v437, 0.0
  %v704 = vmax.f32 %v442, 0.0
  %v705 = vmax.f32 %v447, 0.0
  %v706 = vmax.f32 %v452, 0.0
  %v707 = vmax.f32 %v457, 0.0
  %v708 = vmax.f32 %v462, 0.0
  %v709 = vmax.f32 %v467, 0.0
  %v710 = vmax.f32 %v472, 0.0
  %v711 = vmax.f32 %v477, 0.0
  %v712 = vmax.f32 %v482, 0.0
  %v713 = vmax.f32 %v487, 0.0
  %v714 = vmax.f32 %v492, 0.0
  %v715 = vmax.f32 %v497, 0.0
  %v716 = vmax.f32 %v502, 0.0
  %v717 = vmax.f32 %v507, 0.0
  %v718 = vmax.f32 %v512, 0.0
  %v719 = vmax.f32 %v517, 0.0
  %v720 = vmax.f32 %v522, 0.0
  %v721 = vmax.f32 %v527, 0.0
  %v722 = vmax.f32 %v532, 0.0
  %v723 = vmax.f32 %v537, 0.0
  %v724 = vmax.f32 %v542, 0.0
  %v725 = vmax.f32 %v547, 0.0
  %v726 = vmax.f32 %v552, 0.0
  %v727 = vmax.f32 %v557, 0.0
  %v728 = vmax.f32 %v562, 0.0
  %v729 = vmax.f32 %v567, 0.0
  %v730 = vmax.f32 %v572, 0.0
  %v731 = vmax.f32 %v577, 0.0
  %v732 = vmax.f32 %v582, 0.0
  %v733 = vmax.f32 %v587, 0.0
  %v734 = vmax.f32 %v592, 0.0
  %v735 = vmax.f32 %v597, 0.0
  %v736 = vmax.f32 %v602, 0.0
  %v737 = vmax.f32 %v607, 0.0
  %v738 = vmax.f32 %v612, 0.0
  %v739 = vmax.f32 %v617, 0.0
  %v740 = vmax.f32 %v622, 0.0
  %v741 = vmax.f32 %v627, 0.0
  %v742 = vmax.f32 %v632, 0.0
  %v743 = vmax.f32 %v637, 0.0
  %v744 = vmax.f32 %v642, 0.0
  %v745 = vmax.f32 %v647, 0.0
  %v746 = vmax.f32 %v652, 0.0
  %v747 = vmax.f32 %v657, 0.0
  %v748 = vmax.f32 %v662, 0.0
  %v749 = vmax.f32 %v667, 0.0
  %v750 = vmax.f32 %v672, 0.0
  %v751 = vmax.f32 %v677, 0.0
  %v752 = vmax.f32 %v682, 0.0
  %v753 = vmax.f32 %v687, 0.0
  %vm754 = vcmask 130048
  %755 = vst.msk [vmem:[#allocation2] sm:$0xff] %vm754, %v690
  %757 = vrot.lane.b32.xlu0 %v691, 16
  %v758 = vpop.permute.xlu0 %757
  %vm760 = vcmask 261248
  %761 = vst.msk [vmem:[#allocation2] sm:$0xff] %vm760, %v758
  %763 = vrot.lane.b32.xlu0 %v692, 32
  %v764 = vpop.permute.xlu0 %763
  %vm766 = vcmask 392448
  %767 = vst.msk [vmem:[#allocation2] sm:$0xff] %vm766, %v764
  %769 = vrot.lane.b32.xlu0 %v693, 48
  %v770 = vpop.permute.xlu0 %769
  %vm772 = vcmask 523648
  %773 = vst.msk [vmem:[#allocation2] sm:$0xff] %vm772, %v770
  %775 = vrot.lane.b32.xlu0 %v694, 64
  %v776 = vpop.permute.xlu0 %775
  %vm778 = vcmask 654848
  %779 = vst.msk [vmem:[#allocation2] sm:$0xff] %vm778, %v776
  %781 = vrot.lane.b32.xlu0 %v695, 80
  %v782 = vpop.permute.xlu0 %781
  %vm784 = vcmask 786048
  %785 = vst.msk [vmem:[#allocation2] sm:$0xff] %vm784, %v782
  %787 = vrot.lane.b32.xlu0 %v696, 96
  %v788 = vpop.permute.xlu0 %787
  %vm790 = vcmask 917248
  %791 = vst.msk [vmem:[#allocation2] sm:$0xff] %vm790, %v788
  %793 = vrot.lane.b32.xlu0 %v697, 112
  %v794 = vpop.permute.xlu0 %793
  %vm796 = vcmask 1048448
  %797 = vst.msk [vmem:[#allocation2] sm:$0xff] %vm796, %v794
  %798 = vst.msk [vmem:[#allocation2 + $0x8] sm:$0xff] %vm754, %v698
  %800 = vrot.lane.b32.xlu0 %v699, 16
  %v801 = vpop.permute.xlu0 %800
  %803 = vst.msk [vmem:[#allocation2 + $0x8] sm:$0xff] %vm760, %v801
  %805 = vrot.lane.b32.xlu0 %v700, 32
  %v806 = vpop.permute.xlu0 %805
  %808 = vst.msk [vmem:[#allocation2 + $0x8] sm:$0xff] %vm766, %v806
  %810 = vrot.lane.b32.xlu0 %v701, 48
  %v811 = vpop.permute.xlu0 %810
  %813 = vst.msk [vmem:[#allocation2 + $0x8] sm:$0xff] %vm772, %v811
  %815 = vrot.lane.b32.xlu0 %v702, 64
  %v816 = vpop.permute.xlu0 %815
  %818 = vst.msk [vmem:[#allocation2 + $0x8] sm:$0xff] %vm778, %v816
  %820 = vrot.lane.b32.xlu0 %v703, 80
  %v821 = vpop.permute.xlu0 %820
  %823 = vst.msk [vmem:[#allocation2 + $0x8] sm:$0xff] %vm784, %v821
  %825 = vrot.lane.b32.xlu0 %v704, 96
  %v826 = vpop.permute.xlu0 %825
  %828 = vst.msk [vmem:[#allocation2 + $0x8] sm:$0xff] %vm790, %v826
  %830 = vrot.lane.b32.xlu0 %v705, 112
  %v831 = vpop.permute.xlu0 %830
  %833 = vst.msk [vmem:[#allocation2 + $0x8] sm:$0xff] %vm796, %v831
  %834 = vst.msk [vmem:[#allocation2 + $0x10] sm:$0xff] %vm754, %v706
  %836 = vrot.lane.b32.xlu0 %v707, 16
  %v837 = vpop.permute.xlu0 %836
  %839 = vst.msk [vmem:[#allocation2 + $0x10] sm:$0xff] %vm760, %v837
  %841 = vrot.lane.b32.xlu0 %v708, 32
  %v842 = vpop.permute.xlu0 %841
  %844 = vst.msk [vmem:[#allocation2 + $0x10] sm:$0xff] %vm766, %v842
  %846 = vrot.lane.b32.xlu0 %v709, 48
  %v847 = vpop.permute.xlu0 %846
  %849 = vst.msk [vmem:[#allocation2 + $0x10] sm:$0xff] %vm772, %v847
  %851 = vrot.lane.b32.xlu0 %v710, 64
  %v852 = vpop.permute.xlu0 %851
  %854 = vst.msk [vmem:[#allocation2 + $0x10] sm:$0xff] %vm778, %v852
  %856 = vrot.lane.b32.xlu0 %v711, 80
  %v857 = vpop.permute.xlu0 %856
  %859 = vst.msk [vmem:[#allocation2 + $0x10] sm:$0xff] %vm784, %v857
  %861 = vrot.lane.b32.xlu0 %v712, 96
  %v862 = vpop.permute.xlu0 %861
  %864 = vst.msk [vmem:[#allocation2 + $0x10] sm:$0xff] %vm790, %v862
  %866 = vrot.lane.b32.xlu0 %v713, 112
  %v867 = vpop.permute.xlu0 %866
  %869 = vst.msk [vmem:[#allocation2 + $0x10] sm:$0xff] %vm796, %v867
  %870 = vst.msk [vmem:[#allocation2 + $0x18] sm:$0xff] %vm754, %v714
  %872 = vrot.lane.b32.xlu0 %v715, 16
  %v873 = vpop.permute.xlu0 %872
  %875 = vst.msk [vmem:[#allocation2 + $0x18] sm:$0xff] %vm760, %v873
  %877 = vrot.lane.b32.xlu0 %v716, 32
  %v878 = vpop.permute.xlu0 %877
  %880 = vst.msk [vmem:[#allocation2 + $0x18] sm:$0xff] %vm766, %v878
  %882 = vrot.lane.b32.xlu0 %v717, 48
  %v883 = vpop.permute.xlu0 %882
  %885 = vst.msk [vmem:[#allocation2 + $0x18] sm:$0xff] %vm772, %v883
  %887 = vrot.lane.b32.xlu0 %v718, 64
  %v888 = vpop.permute.xlu0 %887
  %890 = vst.msk [vmem:[#allocation2 + $0x18] sm:$0xff] %vm778, %v888
  %892 = vrot.lane.b32.xlu0 %v719, 80
  %v893 = vpop.permute.xlu0 %892
  %895 = vst.msk [vmem:[#allocation2 + $0x18] sm:$0xff] %vm784, %v893
  %897 = vrot.lane.b32.xlu0 %v720, 96
  %v898 = vpop.permute.xlu0 %897
  %900 = vst.msk [vmem:[#allocation2 + $0x18] sm:$0xff] %vm790, %v898
  %902 = vrot.lane.b32.xlu0 %v721, 112
  %v903 = vpop.permute.xlu0 %902
  %905 = vst.msk [vmem:[#allocation2 + $0x18] sm:$0xff] %vm796, %v903
  %906 = vst.msk [vmem:[#allocation2 + $0x20] sm:$0xff] %vm754, %v722
  %908 = vrot.lane.b32.xlu0 %v723, 16
  %v909 = vpop.permute.xlu0 %908
  %911 = vst.msk [vmem:[#allocation2 + $0x20] sm:$0xff] %vm760, %v909
  %913 = vrot.lane.b32.xlu0 %v724, 32
  %v914 = vpop.permute.xlu0 %913
  %916 = vst.msk [vmem:[#allocation2 + $0x20] sm:$0xff] %vm766, %v914
  %918 = vrot.lane.b32.xlu0 %v725, 48
  %v919 = vpop.permute.xlu0 %918
  %921 = vst.msk [vmem:[#allocation2 + $0x20] sm:$0xff] %vm772, %v919
  %923 = vrot.lane.b32.xlu0 %v726, 64
  %v924 = vpop.permute.xlu0 %923
  %926 = vst.msk [vmem:[#allocation2 + $0x20] sm:$0xff] %vm778, %v924
  %928 = vrot.lane.b32.xlu0 %v727, 80
  %v929 = vpop.permute.xlu0 %928
  %931 = vst.msk [vmem:[#allocation2 + $0x20] sm:$0xff] %vm784, %v929
  %933 = vrot.lane.b32.xlu0 %v728, 96
  %v934 = vpop.permute.xlu0 %933
  %936 = vst.msk [vmem:[#allocation2 + $0x20] sm:$0xff] %vm790, %v934
  %938 = vrot.lane.b32.xlu0 %v729, 112
  %v939 = vpop.permute.xlu0 %938
  %941 = vst.msk [vmem:[#allocation2 + $0x20] sm:$0xff] %vm796, %v939
  %942 = vst.msk [vmem:[#allocation2 + $0x28] sm:$0xff] %vm754, %v730
  %944 = vrot.lane.b32.xlu0 %v731, 16
  %v945 = vpop.permute.xlu0 %944
  %947 = vst.msk [vmem:[#allocation2 + $0x28] sm:$0xff] %vm760, %v945
  %949 = vrot.lane.b32.xlu0 %v732, 32
  %v950 = vpop.permute.xlu0 %949
  %952 = vst.msk [vmem:[#allocation2 + $0x28] sm:$0xff] %vm766, %v950
  %954 = vrot.lane.b32.xlu0 %v733, 48
  %v955 = vpop.permute.xlu0 %954
  %957 = vst.msk [vmem:[#allocation2 + $0x28] sm:$0xff] %vm772, %v955
  %959 = vrot.lane.b32.xlu0 %v734, 64
  %v960 = vpop.permute.xlu0 %959
  %962 = vst.msk [vmem:[#allocation2 + $0x28] sm:$0xff] %vm778, %v960
  %964 = vrot.lane.b32.xlu0 %v735, 80
  %v965 = vpop.permute.xlu0 %964
  %967 = vst.msk [vmem:[#allocation2 + $0x28] sm:$0xff] %vm784, %v965
  %969 = vrot.lane.b32.xlu0 %v736, 96
  %v970 = vpop.permute.xlu0 %969
  %972 = vst.msk [vmem:[#allocation2 + $0x28] sm:$0xff] %vm790, %v970
  %974 = vrot.lane.b32.xlu0 %v737, 112
  %v975 = vpop.permute.xlu0 %974
  %977 = vst.msk [vmem:[#allocation2 + $0x28] sm:$0xff] %vm796, %v975
  %978 = vst.msk [vmem:[#allocation2 + $0x30] sm:$0xff] %vm754, %v738
  %980 = vrot.lane.b32.xlu0 %v739, 16
  %v981 = vpop.permute.xlu0 %980
  %983 = vst.msk [vmem:[#allocation2 + $0x30] sm:$0xff] %vm760, %v981
  %985 = vrot.lane.b32.xlu0 %v740, 32
  %v986 = vpop.permute.xlu0 %985
  %988 = vst.msk [vmem:[#allocation2 + $0x30] sm:$0xff] %vm766, %v986
  %990 = vrot.lane.b32.xlu0 %v741, 48
  %v991 = vpop.permute.xlu0 %990
  %993 = vst.msk [vmem:[#allocation2 + $0x30] sm:$0xff] %vm772, %v991
  %995 = vrot.lane.b32.xlu0 %v742, 64
  %v996 = vpop.permute.xlu0 %995
  %998 = vst.msk [vmem:[#allocation2 + $0x30] sm:$0xff] %vm778, %v996
  %1000 = vrot.lane.b32.xlu0 %v743, 80
  %v1001 = vpop.permute.xlu0 %1000
  %1003 = vst.msk [vmem:[#allocation2 + $0x30] sm:$0xff] %vm784, %v1001
  %1005 = vrot.lane.b32.xlu0 %v744, 96
  %v1006 = vpop.permute.xlu0 %1005
  %1008 = vst.msk [vmem:[#allocation2 + $0x30] sm:$0xff] %vm790, %v1006
  %1010 = vrot.lane.b32.xlu0 %v745, 112
  %v1011 = vpop.permute.xlu0 %1010
  %1013 = vst.msk [vmem:[#allocation2 + $0x30] sm:$0xff] %vm796, %v1011
  %1014 = vst.msk [vmem:[#allocation2 + $0x38] sm:$0xff] %vm754, %v746
  %1016 = vrot.lane.b32.xlu0 %v747, 16
  %v1017 = vpop.permute.xlu0 %1016
  %1019 = vst.msk [vmem:[#allocation2 + $0x38] sm:$0xff] %vm760, %v1017
  %1021 = vrot.lane.b32.xlu0 %v748, 32
  %v1022 = vpop.permute.xlu0 %1021
  %1024 = vst.msk [vmem:[#allocation2 + $0x38] sm:$0xff] %vm766, %v1022
  %1026 = vrot.lane.b32.xlu0 %v749, 48
  %v1027 = vpop.permute.xlu0 %1026
  %1029 = vst.msk [vmem:[#allocation2 + $0x38] sm:$0xff] %vm772, %v1027
  %1031 = vrot.lane.b32.xlu0 %v750, 64
  %v1032 = vpop.permute.xlu0 %1031
  %1034 = vst.msk [vmem:[#allocation2 + $0x38] sm:$0xff] %vm778, %v1032
  %1036 = vrot.lane.b32.xlu0 %v751, 80
  %v1037 = vpop.permute.xlu0 %1036
  %1039 = vst.msk [vmem:[#allocation2 + $0x38] sm:$0xff] %vm784, %v1037
  %1041 = vrot.lane.b32.xlu0 %v752, 96
  %v1042 = vpop.permute.xlu0 %1041
  %1044 = vst.msk [vmem:[#allocation2 + $0x38] sm:$0xff] %vm790, %v1042
  %1046 = vrot.lane.b32.xlu0 %v753, 112
  %v1047 = vpop.permute.xlu0 %1046
  %1049 = vst.msk [vmem:[#allocation2 + $0x38] sm:$0xff] %vm796, %v1047
  %v1050 = vld [vmem:[#allocation2] sm:$0xff]
  %v1051 = vld [vmem:[#allocation2 + $0x8] sm:$0xff]
  %v1052 = vld [vmem:[#allocation2 + $0x10] sm:$0xff]
  %v1053 = vld [vmem:[#allocation2 + $0x18] sm:$0xff]
  %v1054 = vld [vmem:[#allocation2 + $0x20] sm:$0xff]
  %v1055 = vld [vmem:[#allocation2 + $0x28] sm:$0xff]
  %v1056 = vld [vmem:[#allocation2 + $0x30] sm:$0xff]
  %v1057 = vld [vmem:[#allocation2 + $0x38] sm:$0xff]
  %v1058 = vld [vmem:[%s3] sm:$0xff]
  %v1059 = vld [vmem:[%s3 + $0x8] sm:$0xff]
  %v1060 = vld [vmem:[%s3 + $0x10] sm:$0xff]
  %v1061 = vld [vmem:[%s3 + $0x18] sm:$0xff]
  %v1062 = vld [vmem:[%s3 + $0x20] sm:$0xff]
  %v1063 = vld [vmem:[%s3 + $0x28] sm:$0xff]
  %v1064 = vld [vmem:[%s3 + $0x30] sm:$0xff]
  %v1065 = vld [vmem:[%s3 + $0x38] sm:$0xff]
  %v1066 = vld [vmem:[%s3 + $0x40] sm:$0xff]
  %v1067 = vld [vmem:[%s3 + $0x48] sm:$0xff]
  %v1068 = vld [vmem:[%s3 + $0x50] sm:$0xff]
  %v1069 = vld [vmem:[%s3 + $0x58] sm:$0xff]
  %v1070 = vld [vmem:[%s3 + $0x60] sm:$0xff]
  %v1071 = vld [vmem:[%s3 + $0x68] sm:$0xff]
  %v1072 = vld [vmem:[%s3 + $0x70] sm:$0xff]
  %v1073 = vld [vmem:[%s3 + $0x78] sm:$0xff]
  %v1074 = vld [vmem:[%s3 + $0x80] sm:$0xff]
  %v1075 = vld [vmem:[%s3 + $0x88] sm:$0xff]
  %v1076 = vld [vmem:[%s3 + $0x90] sm:$0xff]
  %v1077 = vld [vmem:[%s3 + $0x98] sm:$0xff]
  %v1078 = vld [vmem:[%s3 + $0xa0] sm:$0xff]
  %v1079 = vld [vmem:[%s3 + $0xa8] sm:$0xff]
  %v1080 = vld [vmem:[%s3 + $0xb0] sm:$0xff]
  %v1081 = vld [vmem:[%s3 + $0xb8] sm:$0xff]
  %v1082 = vld [vmem:[%s3 + $0xc0] sm:$0xff]
  %v1083 = vld [vmem:[%s3 + $0xc8] sm:$0xff]
  %v1084 = vld [vmem:[%s3 + $0xd0] sm:$0xff]
  %v1085 = vld [vmem:[%s3 + $0xd8] sm:$0xff]
  %v1086 = vld [vmem:[%s3 + $0xe0] sm:$0xff]
  %v1087 = vld [vmem:[%s3 + $0xe8] sm:$0xff]
  %v1088 = vld [vmem:[%s3 + $0xf0] sm:$0xff]
  %v1089 = vld [vmem:[%s3 + $0xf8] sm:$0xff]
  %v1090 = vld [vmem:[%s3 + $0x100] sm:$0xff]
  %v1091 = vld [vmem:[%s3 + $0x108] sm:$0xff]
  %v1092 = vld [vmem:[%s3 + $0x110] sm:$0xff]
  %v1093 = vld [vmem:[%s3 + $0x118] sm:$0xff]
  %v1094 = vld [vmem:[%s3 + $0x120] sm:$0xff]
  %v1095 = vld [vmem:[%s3 + $0x128] sm:$0xff]
  %v1096 = vld [vmem:[%s3 + $0x130] sm:$0xff]
  %v1097 = vld [vmem:[%s3 + $0x138] sm:$0xff]
  %v1098 = vld [vmem:[%s3 + $0x140] sm:$0xff]
  %v1099 = vld [vmem:[%s3 + $0x148] sm:$0xff]
  %v1100 = vld [vmem:[%s3 + $0x150] sm:$0xff]
  %v1101 = vld [vmem:[%s3 + $0x158] sm:$0xff]
  %v1102 = vld [vmem:[%s3 + $0x160] sm:$0xff]
  %v1103 = vld [vmem:[%s3 + $0x168] sm:$0xff]
  %v1104 = vld [vmem:[%s3 + $0x170] sm:$0xff]
  %v1105 = vld [vmem:[%s3 + $0x178] sm:$0xff]
  %v1106 = vld [vmem:[%s3 + $0x180] sm:$0xff]
  %v1107 = vld [vmem:[%s3 + $0x188] sm:$0xff]
  %v1108 = vld [vmem:[%s3 + $0x190] sm:$0xff]
  %v1109 = vld [vmem:[%s3 + $0x198] sm:$0xff]
  %v1110 = vld [vmem:[%s3 + $0x1a0] sm:$0xff]
  %v1111 = vld [vmem:[%s3 + $0x1a8] sm:$0xff]
  %v1112 = vld [vmem:[%s3 + $0x1b0] sm:$0xff]
  %v1113 = vld [vmem:[%s3 + $0x1b8] sm:$0xff]
  %v1114 = vld [vmem:[%s3 + $0x1c0] sm:$0xff]
  %v1115 = vld [vmem:[%s3 + $0x1c8] sm:$0xff]
  %v1116 = vld [vmem:[%s3 + $0x1d0] sm:$0xff]
  %v1117 = vld [vmem:[%s3 + $0x1d8] sm:$0xff]
  %v1118 = vld [vmem:[%s3 + $0x1e0] sm:$0xff]
  %v1119 = vld [vmem:[%s3 + $0x1e8] sm:$0xff]
  %v1120 = vld [vmem:[%s3 + $0x1f0] sm:$0xff]
  %v1121 = vld [vmem:[%s3 + $0x1f8] sm:$0xff]
  %v1122 = vld [vmem:[%s3 + $0x200] sm:$0xff]
  %v1123 = vld [vmem:[%s3 + $0x208] sm:$0xff]
  %v1124 = vld [vmem:[%s3 + $0x210] sm:$0xff]
  %v1125 = vld [vmem:[%s3 + $0x218] sm:$0xff]
  %v1126 = vld [vmem:[%s3 + $0x220] sm:$0xff]
  %v1127 = vld [vmem:[%s3 + $0x228] sm:$0xff]
  %v1128 = vld [vmem:[%s3 + $0x230] sm:$0xff]
  %v1129 = vld [vmem:[%s3 + $0x238] sm:$0xff]
  %v1130 = vld [vmem:[%s3 + $0x240] sm:$0xff]
  %v1131 = vld [vmem:[%s3 + $0x248] sm:$0xff]
  %v1132 = vld [vmem:[%s3 + $0x250] sm:$0xff]
  %v1133 = vld [vmem:[%s3 + $0x258] sm:$0xff]
  %v1134 = vld [vmem:[%s3 + $0x260] sm:$0xff]
  %v1135 = vld [vmem:[%s3 + $0x268] sm:$0xff]
  %v1136 = vld [vmem:[%s3 + $0x270] sm:$0xff]
  %v1137 = vld [vmem:[%s3 + $0x278] sm:$0xff]
  %v1138 = vld [vmem:[%s3 + $0x280] sm:$0xff]
  %v1139 = vld [vmem:[%s3 + $0x288] sm:$0xff]
  %v1140 = vld [vmem:[%s3 + $0x290] sm:$0xff]
  %v1141 = vld [vmem:[%s3 + $0x298] sm:$0xff]
  %v1142 = vld [vmem:[%s3 + $0x2a0] sm:$0xff]
  %v1143 = vld [vmem:[%s3 + $0x2a8] sm:$0xff]
  %v1144 = vld [vmem:[%s3 + $0x2b0] sm:$0xff]
  %v1145 = vld [vmem:[%s3 + $0x2b8] sm:$0xff]
  %v1146 = vld [vmem:[%s3 + $0x2c0] sm:$0xff]
  %v1147 = vld [vmem:[%s3 + $0x2c8] sm:$0xff]
  %v1148 = vld [vmem:[%s3 + $0x2d0] sm:$0xff]
  %v1149 = vld [vmem:[%s3 + $0x2d8] sm:$0xff]
  %v1150 = vld [vmem:[%s3 + $0x2e0] sm:$0xff]
  %v1151 = vld [vmem:[%s3 + $0x2e8] sm:$0xff]
  %v1152 = vld [vmem:[%s3 + $0x2f0] sm:$0xff]
  %v1153 = vld [vmem:[%s3 + $0x2f8] sm:$0xff]
  %v1154 = vld [vmem:[%s3 + $0x300] sm:$0xff]
  %v1155 = vld [vmem:[%s3 + $0x308] sm:$0xff]
  %v1156 = vld [vmem:[%s3 + $0x310] sm:$0xff]
  %v1157 = vld [vmem:[%s3 + $0x318] sm:$0xff]
  %v1158 = vld [vmem:[%s3 + $0x320] sm:$0xff]
  %v1159 = vld [vmem:[%s3 + $0x328] sm:$0xff]
  %v1160 = vld [vmem:[%s3 + $0x330] sm:$0xff]
  %v1161 = vld [vmem:[%s3 + $0x338] sm:$0xff]
  %v1162 = vld [vmem:[%s3 + $0x340] sm:$0xff]
  %v1163 = vld [vmem:[%s3 + $0x348] sm:$0xff]
  %v1164 = vld [vmem:[%s3 + $0x350] sm:$0xff]
  %v1165 = vld [vmem:[%s3 + $0x358] sm:$0xff]
  %v1166 = vld [vmem:[%s3 + $0x360] sm:$0xff]
  %v1167 = vld [vmem:[%s3 + $0x368] sm:$0xff]
  %v1168 = vld [vmem:[%s3 + $0x370] sm:$0xff]
  %v1169 = vld [vmem:[%s3 + $0x378] sm:$0xff]
  %v1170 = vld [vmem:[%s3 + $0x380] sm:$0xff]
  %v1171 = vld [vmem:[%s3 + $0x388] sm:$0xff]
  %v1172 = vld [vmem:[%s3 + $0x390] sm:$0xff]
  %v1173 = vld [vmem:[%s3 + $0x398] sm:$0xff]
  %v1174 = vld [vmem:[%s3 + $0x3a0] sm:$0xff]
  %v1175 = vld [vmem:[%s3 + $0x3a8] sm:$0xff]
  %v1176 = vld [vmem:[%s3 + $0x3b0] sm:$0xff]
  %v1177 = vld [vmem:[%s3 + $0x3b8] sm:$0xff]
  %v1178 = vld [vmem:[%s3 + $0x3c0] sm:$0xff]
  %v1179 = vld [vmem:[%s3 + $0x3c8] sm:$0xff]
  %v1180 = vld [vmem:[%s3 + $0x3d0] sm:$0xff]
  %v1181 = vld [vmem:[%s3 + $0x3d8] sm:$0xff]
  %v1182 = vld [vmem:[%s3 + $0x3e0] sm:$0xff]
  %v1183 = vld [vmem:[%s3 + $0x3e8] sm:$0xff]
  %v1184 = vld [vmem:[%s3 + $0x3f0] sm:$0xff]
  %v1185 = vld [vmem:[%s3 + $0x3f8] sm:$0xff]
  %v1186 = vld [vmem:[%s4] sm:$0x1]
  %v1188 = vlaneseq
  %v1189 = vshrl.u32 %v1188, 7
  %v1190 = vsub.s32 0, %v1189
  %v1191 = vrot.slane %v1186, %v1190
  %1193 = vmatprep.subr.mxu0 0.0
  %1194 = vmatpush1.msra.mxu0 %v1058
  %1195 = vmatprep.subr.mxu0 0.0
  %1196 = vmatpush1.msra.mxu0 %v1059
  %1197 = vmatprep.subr.mxu0 0.0
  %1198 = vmatpush1.msra.mxu0 %v1060
  %1199 = vmatprep.subr.mxu0 0.0
  %1200 = vmatpush1.msra.mxu0 %v1061
  %1201 = vmatprep.subr.mxu0 0.0
  %1202 = vmatpush1.msra.mxu0 %v1062
  %1203 = vmatprep.subr.mxu0 0.0
  %1204 = vmatpush1.msra.mxu0 %v1063
  %1205 = vmatprep.subr.mxu0 0.0
  %1206 = vmatpush1.msra.mxu0 %v1064
  %1207 = vmatprep.subr.mxu0 0.0
  %1208 = vmatpush1.msra.mxu0 %v1065
  %1209 = vmatprep.subr.mxu0 0.0
  %1210 = vmatpush1.msra.mxu0 %v1066
  %1211 = vmatprep.subr.mxu0 0.0
  %1212 = vmatpush1.msra.mxu0 %v1067
  %1213 = vmatprep.subr.mxu0 0.0
  %1214 = vmatpush1.msra.mxu0 %v1068
  %1215 = vmatprep.subr.mxu0 0.0
  %1216 = vmatpush1.msra.mxu0 %v1069
  %1217 = vmatprep.subr.mxu0 0.0
  %1218 = vmatpush1.msra.mxu0 %v1070
  %1219 = vmatprep.subr.mxu0 0.0
  %1220 = vmatpush1.msra.mxu0 %v1071
  %1221 = vmatprep.subr.mxu0 0.0
  %1222 = vmatpush1.msra.mxu0 %v1072
  %1223 = vmatprep.subr.mxu0 0.0
  %1224 = vmatpush1.msra.mxu0 %v1073
  %1225 = vmatprep.subr.mxu0 0.0
  %1226 = vmatpush1.msra.mxu0 %v1074
  %1227 = vmatprep.subr.mxu0 0.0
  %1228 = vmatpush1.msra.mxu0 %v1075
  %1229 = vmatprep.subr.mxu0 0.0
  %1230 = vmatpush1.msra.mxu0 %v1076
  %1231 = vmatprep.subr.mxu0 0.0
  %1232 = vmatpush1.msra.mxu0 %v1077
  %1233 = vmatprep.subr.mxu0 0.0
  %1234 = vmatpush1.msra.mxu0 %v1078
  %1235 = vmatprep.subr.mxu0 0.0
  %1236 = vmatpush1.msra.mxu0 %v1079
  %1237 = vmatprep.subr.mxu0 0.0
  %1238 = vmatpush1.msra.mxu0 %v1080
  %1239 = vmatprep.subr.mxu0 0.0
  %1240 = vmatpush1.msra.mxu0 %v1081
  %1241 = vmatprep.subr.mxu0 0.0
  %1242 = vmatpush1.msra.mxu0 %v1082
  %1243 = vmatprep.subr.mxu0 0.0
  %1244 = vmatpush1.msra.mxu0 %v1083
  %1245 = vmatprep.subr.mxu0 0.0
  %1246 = vmatpush1.msra.mxu0 %v1084
  %1247 = vmatprep.subr.mxu0 0.0
  %1248 = vmatpush1.msra.mxu0 %v1085
  %1249 = vmatprep.subr.mxu0 0.0
  %1250 = vmatpush1.msra.mxu0 %v1086
  %1251 = vmatprep.subr.mxu0 0.0
  %1252 = vmatpush1.msra.mxu0 %v1087
  %1253 = vmatprep.subr.mxu0 0.0
  %1254 = vmatpush1.msra.mxu0 %v1088
  %1255 = vmatprep.subr.mxu0 0.0
  %1256 = vmatpush1.msra.mxu0 %v1089
  %1257 = vmatprep.mubr.f32.mxu0 %v1051
  %1258 = vmatmul.mubr.f32.gmra.mrb[0].mxu0 %v1050
  %v1259 = vpop.f32.mrb[0].mxu0
  %v1260 = vadd.f32 %v1191, %v1259
  %v1261 = vpop.f32.mrb[0].mxu0
  %1262 = vdwg.mxu0
  %1263 = vmatprep.subr.mxu0 0.0
  %1264 = vmatpush1.msra.mxu0 %v1090
  %1265 = vmatprep.subr.mxu0 0.0
  %1266 = vmatpush1.msra.mxu0 %v1091
  %1267 = vmatprep.subr.mxu0 0.0
  %1268 = vmatpush1.msra.mxu0 %v1092
  %1269 = vmatprep.subr.mxu0 0.0
  %1270 = vmatpush1.msra.mxu0 %v1093
  %1271 = vmatprep.subr.mxu0 0.0
  %1272 = vmatpush1.msra.mxu0 %v1094
  %1273 = vmatprep.subr.mxu0 0.0
  %1274 = vmatpush1.msra.mxu0 %v1095
  %1275 = vmatprep.subr.mxu0 0.0
  %1276 = vmatpush1.msra.mxu0 %v1096
  %1277 = vmatprep.subr.mxu0 0.0
  %1278 = vmatpush1.msra.mxu0 %v1097
  %1279 = vmatprep.subr.mxu0 0.0
  %1280 = vmatpush1.msra.mxu0 %v1098
  %1281 = vmatprep.subr.mxu0 0.0
  %1282 = vmatpush1.msra.mxu0 %v1099
  %1283 = vmatprep.subr.mxu0 0.0
  %1284 = vmatpush1.msra.mxu0 %v1100
  %1285 = vmatprep.subr.mxu0 0.0
  %1286 = vmatpush1.msra.mxu0 %v1101
  %1287 = vmatprep.subr.mxu0 0.0
  %1288 = vmatpush1.msra.mxu0 %v1102
  %1289 = vmatprep.subr.mxu0 0.0
  %1290 = vmatpush1.msra.mxu0 %v1103
  %1291 = vmatprep.subr.mxu0 0.0
  %1292 = vmatpush1.msra.mxu0 %v1104
  %1293 = vmatprep.subr.mxu0 0.0
  %1294 = vmatpush1.msra.mxu0 %v1105
  %1295 = vmatprep.subr.mxu0 0.0
  %1296 = vmatpush1.msra.mxu0 %v1106
  %1297 = vmatprep.subr.mxu0 0.0
  %1298 = vmatpush1.msra.mxu0 %v1107
  %1299 = vmatprep.subr.mxu0 0.0
  %1300 = vmatpush1.msra.mxu0 %v1108
  %1301 = vmatprep.subr.mxu0 0.0
  %1302 = vmatpush1.msra.mxu0 %v1109
  %1303 = vmatprep.subr.mxu0 0.0
  %1304 = vmatpush1.msra.mxu0 %v1110
  %1305 = vmatprep.subr.mxu0 0.0
  %1306 = vmatpush1.msra.mxu0 %v1111
  %1307 = vmatprep.subr.mxu0 0.0
  %1308 = vmatpush1.msra.mxu0 %v1112
  %1309 = vmatprep.subr.mxu0 0.0
  %1310 = vmatpush1.msra.mxu0 %v1113
  %1311 = vmatprep.subr.mxu0 0.0
  %1312 = vmatpush1.msra.mxu0 %v1114
  %1313 = vmatprep.subr.mxu0 0.0
  %1314 = vmatpush1.msra.mxu0 %v1115
  %1315 = vmatprep.subr.mxu0 0.0
  %1316 = vmatpush1.msra.mxu0 %v1116
  %1317 = vmatprep.subr.mxu0 0.0
  %1318 = vmatpush1.msra.mxu0 %v1117
  %1319 = vmatprep.subr.mxu0 0.0
  %1320 = vmatpush1.msra.mxu0 %v1118
  %1321 = vmatprep.subr.mxu0 0.0
  %1322 = vmatpush1.msra.mxu0 %v1119
  %1323 = vmatprep.subr.mxu0 0.0
  %1324 = vmatpush1.msra.mxu0 %v1120
  %1325 = vmatprep.subr.mxu0 0.0
  %1326 = vmatpush1.msra.mxu0 %v1121
  %1327 = vmatprep.mubr.f32.mxu0 %v1053
  %1328 = vmatmul.mubr.f32.gmra.mrb[0].mxu0 %v1052
  %v1329 = vpop.f32.mrb[0].mxu0
  %v1330 = vadd.f32 %v1260, %v1329
  %v1331 = vpop.f32.mrb[0].mxu0
  %1332 = vdwg.mxu0
  %1333 = vmatprep.subr.mxu0 0.0
  %1334 = vmatpush1.msra.mxu0 %v1122
  %1335 = vmatprep.subr.mxu0 0.0
  %1336 = vmatpush1.msra.mxu0 %v1123
  %1337 = vmatprep.subr.mxu0 0.0
  %1338 = vmatpush1.msra.mxu0 %v1124
  %1339 = vmatprep.subr.mxu0 0.0
  %1340 = vmatpush1.msra.mxu0 %v1125
  %1341 = vmatprep.subr.mxu0 0.0
  %1342 = vmatpush1.msra.mxu0 %v1126
  %1343 = vmatprep.subr.mxu0 0.0
  %1344 = vmatpush1.msra.mxu0 %v1127
  %1345 = vmatprep.subr.mxu0 0.0
  %1346 = vmatpush1.msra.mxu0 %v1128
  %1347 = vmatprep.subr.mxu0 0.0
  %1348 = vmatpush1.msra.mxu0 %v1129
  %1349 = vmatprep.subr.mxu0 0.0
  %1350 = vmatpush1.msra.mxu0 %v1130
  %1351 = vmatprep.subr.mxu0 0.0
  %1352 = vmatpush1.msra.mxu0 %v1131
  %1353 = vmatprep.subr.mxu0 0.0
  %1354 = vmatpush1.msra.mxu0 %v1132
  %1355 = vmatprep.subr.mxu0 0.0
  %1356 = vmatpush1.msra.mxu0 %v1133
  %1357 = vmatprep.subr.mxu0 0.0
  %1358 = vmatpush1.msra.mxu0 %v1134
  %1359 = vmatprep.subr.mxu0 0.0
  %1360 = vmatpush1.msra.mxu0 %v1135
  %1361 = vmatprep.subr.mxu0 0.0
  %1362 = vmatpush1.msra.mxu0 %v1136
  %1363 = vmatprep.subr.mxu0 0.0
  %1364 = vmatpush1.msra.mxu0 %v1137
  %1365 = vmatprep.subr.mxu0 0.0
  %1366 = vmatpush1.msra.mxu0 %v1138
  %1367 = vmatprep.subr.mxu0 0.0
  %1368 = vmatpush1.msra.mxu0 %v1139
  %1369 = vmatprep.subr.mxu0 0.0
  %1370 = vmatpush1.msra.mxu0 %v1140
  %1371 = vmatprep.subr.mxu0 0.0
  %1372 = vmatpush1.msra.mxu0 %v1141
  %1373 = vmatprep.subr.mxu0 0.0
  %1374 = vmatpush1.msra.mxu0 %v1142
  %1375 = vmatprep.subr.mxu0 0.0
  %1376 = vmatpush1.msra.mxu0 %v1143
  %1377 = vmatprep.subr.mxu0 0.0
  %1378 = vmatpush1.msra.mxu0 %v1144
  %1379 = vmatprep.subr.mxu0 0.0
  %1380 = vmatpush1.msra.mxu0 %v1145
  %1381 = vmatprep.subr.mxu0 0.0
  %1382 = vmatpush1.msra.mxu0 %v1146
  %1383 = vmatprep.subr.mxu0 0.0
  %1384 = vmatpush1.msra.mxu0 %v1147
  %1385 = vmatprep.subr.mxu0 0.0
  %1386 = vmatpush1.msra.mxu0 %v1148
  %1387 = vmatprep.subr.mxu0 0.0
  %1388 = vmatpush1.msra.mxu0 %v1149
  %1389 = vmatprep.subr.mxu0 0.0
  %1390 = vmatpush1.msra.mxu0 %v1150
  %1391 = vmatprep.subr.mxu0 0.0
  %1392 = vmatpush1.msra.mxu0 %v1151
  %1393 = vmatprep.subr.mxu0 0.0
  %1394 = vmatpush1.msra.mxu0 %v1152
  %1395 = vmatprep.subr.mxu0 0.0
  %1396 = vmatpush1.msra.mxu0 %v1153
  %1397 = vmatprep.mubr.f32.mxu0 %v1055
  %1398 = vmatmul.mubr.f32.gmra.mrb[0].mxu0 %v1054
  %v1399 = vpop.f32.mrb[0].mxu0
  %v1400 = vadd.f32 %v1330, %v1399
  %v1401 = vpop.f32.mrb[0].mxu0
  %1402 = vdwg.mxu0
  %1403 = vmatprep.subr.mxu0 0.0
  %1404 = vmatpush1.msra.mxu0 %v1154
  %1405 = vmatprep.subr.mxu0 0.0
  %1406 = vmatpush1.msra.mxu0 %v1155
  %1407 = vmatprep.subr.mxu0 0.0
  %1408 = vmatpush1.msra.mxu0 %v1156
  %1409 = vmatprep.subr.mxu0 0.0
  %1410 = vmatpush1.msra.mxu0 %v1157
  %1411 = vmatprep.subr.mxu0 0.0
  %1412 = vmatpush1.msra.mxu0 %v1158
  %1413 = vmatprep.subr.mxu0 0.0
  %1414 = vmatpush1.msra.mxu0 %v1159
  %1415 = vmatprep.subr.mxu0 0.0
  %1416 = vmatpush1.msra.mxu0 %v1160
  %1417 = vmatprep.subr.mxu0 0.0
  %1418 = vmatpush1.msra.mxu0 %v1161
  %1419 = vmatprep.subr.mxu0 0.0
  %1420 = vmatpush1.msra.mxu0 %v1162
  %1421 = vmatprep.subr.mxu0 0.0
  %1422 = vmatpush1.msra.mxu0 %v1163
  %1423 = vmatprep.subr.mxu0 0.0
  %1424 = vmatpush1.msra.mxu0 %v1164
  %1425 = vmatprep.subr.mxu0 0.0
  %1426 = vmatpush1.msra.mxu0 %v1165
  %1427 = vmatprep.subr.mxu0 0.0
  %1428 = vmatpush1.msra.mxu0 %v1166
  %1429 = vmatprep.subr.mxu0 0.0
  %1430 = vmatpush1.msra.mxu0 %v1167
  %1431 = vmatprep.subr.mxu0 0.0
  %1432 = vmatpush1.msra.mxu0 %v1168
  %1433 = vmatprep.subr.mxu0 0.0
  %1434 = vmatpush1.msra.mxu0 %v1169
  %1435 = vmatprep.subr.mxu0 0.0
  %1436 = vmatpush1.msra.mxu0 %v1170
  %1437 = vmatprep.subr.mxu0 0.0
  %1438 = vmatpush1.msra.mxu0 %v1171
  %1439 = vmatprep.subr.mxu0 0.0
  %1440 = vmatpush1.msra.mxu0 %v1172
  %1441 = vmatprep.subr.mxu0 0.0
  %1442 = vmatpush1.msra.mxu0 %v1173
  %1443 = vmatprep.subr.mxu0 0.0
  %1444 = vmatpush1.msra.mxu0 %v1174
  %1445 = vmatprep.subr.mxu0 0.0
  %1446 = vmatpush1.msra.mxu0 %v1175
  %1447 = vmatprep.subr.mxu0 0.0
  %1448 = vmatpush1.msra.mxu0 %v1176
  %1449 = vmatprep.subr.mxu0 0.0
  %1450 = vmatpush1.msra.mxu0 %v1177
  %1451 = vmatprep.subr.mxu0 0.0
  %1452 = vmatpush1.msra.mxu0 %v1178
  %1453 = vmatprep.subr.mxu0 0.0
  %1454 = vmatpush1.msra.mxu0 %v1179
  %1455 = vmatprep.subr.mxu0 0.0
  %1456 = vmatpush1.msra.mxu0 %v1180
  %1457 = vmatprep.subr.mxu0 0.0
  %1458 = vmatpush1.msra.mxu0 %v1181
  %1459 = vmatprep.subr.mxu0 0.0
  %1460 = vmatpush1.msra.mxu0 %v1182
  %1461 = vmatprep.subr.mxu0 0.0
  %1462 = vmatpush1.msra.mxu0 %v1183
  %1463 = vmatprep.subr.mxu0 0.0
  %1464 = vmatpush1.msra.mxu0 %v1184
  %1465 = vmatprep.subr.mxu0 0.0
  %1466 = vmatpush1.msra.mxu0 %v1185
  %1467 = vmatprep.mubr.f32.mxu0 %v1057
  %1468 = vmatmul.mubr.f32.gmra.mrb[0].mxu0 %v1056
  %v1469 = vpop.f32.mrb[0].mxu0
  %v1470 = vadd.f32 %v1400, %v1469
  %v1471 = vpop.f32.mrb[0].mxu0
  %1472 = vdwg.mxu0
  %v1473 = vmax.f32 %v1470, 0.0
  %v1474 = vld [vmem:[%s5] sm:$0xff]
  %v1475 = vld [vmem:[%s5 + $0x8] sm:$0xff]
  %v1476 = vld [vmem:[%s5 + $0x10] sm:$0xff]
  %v1477 = vld [vmem:[%s5 + $0x18] sm:$0xff]
  %v1478 = vld [vmem:[%s5 + $0x20] sm:$0xff]
  %v1479 = vld [vmem:[%s5 + $0x28] sm:$0xff]
  %v1480 = vld [vmem:[%s5 + $0x30] sm:$0xff]
  %v1481 = vld [vmem:[%s5 + $0x38] sm:$0xff]
  %v1482 = vld [vmem:[%s6] sm:$0x1]
  %v1484 = vlaneseq
  %v1485 = vshrl.u32 %v1484, 7
  %v1486 = vsub.s32 0, %v1485
  %v1487 = vrot.slane %v1482, %v1486
  %vm1489 = vcmask 523264
  %v1491 = vsel %vm1489, %v1473, 0
  %1493 = vmatprep.subr.mxu0 0.0
  %1494 = vmatpush1.msra.mxu0 %v1474
  %1495 = vmatprep.subr.mxu0 0.0
  %1496 = vmatpush1.msra.mxu0 %v1475
  %1497 = vmatprep.subr.mxu0 0.0
  %1498 = vmatpush1.msra.mxu0 %v1476
  %1499 = vmatprep.subr.mxu0 0.0
  %1500 = vmatpush1.msra.mxu0 %v1477
  %1501 = vmatprep.subr.mxu0 0.0
  %1502 = vmatpush1.msra.mxu0 %v1478
  %1503 = vmatprep.subr.mxu0 0.0
  %1504 = vmatpush1.msra.mxu0 %v1479
  %1505 = vmatprep.subr.mxu0 0.0
  %1506 = vmatpush1.msra.mxu0 %v1480
  %1507 = vmatprep.subr.mxu0 0.0
  %1508 = vmatpush1.msra.mxu0 %v1481
  %1509 = vmatprep.subr.mxu0 0.0
  %1510 = vmatpush1.msra.mxu0 0.0
  %1511 = vmatprep.subr.mxu0 0.0
  %1512 = vmatpush1.msra.mxu0 0.0
  %1513 = vmatprep.subr.mxu0 0.0
  %1514 = vmatpush1.msra.mxu0 0.0
  %1515 = vmatprep.subr.mxu0 0.0
  %1516 = vmatpush1.msra.mxu0 0.0
  %1517 = vmatprep.subr.mxu0 0.0
  %1518 = vmatpush1.msra.mxu0 0.0
  %1519 = vmatprep.subr.mxu0 0.0
  %1520 = vmatpush1.msra.mxu0 0.0
  %1521 = vmatprep.subr.mxu0 0.0
  %1522 = vmatpush1.msra.mxu0 0.0
  %1523 = vmatprep.subr.mxu0 0.0
  %1524 = vmatpush1.msra.mxu0 0.0
  %1525 = vmatprep.subr.mxu0 0.0
  %1526 = vmatpush1.msra.mxu0 0.0
  %1527 = vmatprep.subr.mxu0 0.0
  %1528 = vmatpush1.msra.mxu0 0.0
  %1529 = vmatprep.subr.mxu0 0.0
  %1530 = vmatpush1.msra.mxu0 0.0
  %1531 = vmatprep.subr.mxu0 0.0
  %1532 = vmatpush1.msra.mxu0 0.0
  %1533 = vmatprep.subr.mxu0 0.0
  %1534 = vmatpush1.msra.mxu0 0.0
  %1535 = vmatprep.subr.mxu0 0.0
  %1536 = vmatpush1.msra.mxu0 0.0
  %1537 = vmatprep.subr.mxu0 0.0
  %1538 = vmatpush1.msra.mxu0 0.0
  %1539 = vmatprep.subr.mxu0 0.0
  %1540 = vmatpush1.msra.mxu0 0.0
  %1541 = vmatprep.subr.mxu0 0.0
  %1542 = vmatpush1.msra.mxu0 0.0
  %1543 = vmatprep.subr.mxu0 0.0
  %1544 = vmatpush1.msra.mxu0 0.0
  %1545 = vmatprep.subr.mxu0 0.0
  %1546 = vmatpush1.msra.mxu0 0.0
  %1547 = vmatprep.subr.mxu0 0.0
  %1548 = vmatpush1.msra.mxu0 0.0
  %1549 = vmatprep.subr.mxu0 0.0
  %1550 = vmatpush1.msra.mxu0 0.0
  %1551 = vmatprep.subr.mxu0 0.0
  %1552 = vmatpush1.msra.mxu0 0.0
  %1553 = vmatprep.subr.mxu0 0.0
  %1554 = vmatpush1.msra.mxu0 0.0
  %1555 = vmatprep.subr.mxu0 0.0
  %1556 = vmatpush1.msra.mxu0 0.0
  %1557 = vmatprep.mubr.f32.mxu0 0.0
  %1558 = vmatmul.mubr.f32.gmra.mrb[0].mxu0 %v1491
  %v1559 = vpop.f32.mrb[0].mxu0
  %v1560 = vadd.f32 %v1487, %v1559
  %v1561 = vpop.f32.mrb[0].mxu0
  %1562 = vdwg.mxu0
  %v1563 = vmax.f32 %v1560, 0.0
  %v1564 = vld [vmem:[%s7] sm:$0xff]
  %v1565 = vld [vmem:[%s7 + $0x8] sm:$0xff]
  %v1566 = vld [vmem:[%s7 + $0x10] sm:$0xff]
  %v1567 = vld [vmem:[%s7 + $0x18] sm:$0xff]
  %v1568 = vld [vmem:[%s7 + $0x20] sm:$0xff]
  %v1569 = vld [vmem:[%s7 + $0x28] sm:$0xff]
  %v1570 = vld [vmem:[%s7 + $0x30] sm:$0xff]
  %v1571 = vld [vmem:[%s7 + $0x38] sm:$0xff]
  %v1572 = vld [vmem:[%s8] sm:$0x1]
  %v1574 = vlaneseq
  %v1575 = vshrl.u32 %v1574, 7
  %v1576 = vsub.s32 0, %v1575
  %v1577 = vrot.slane %v1572, %v1576
  %v1580 = vsel %vm1489, %v1563, 0
  %1582 = vmatprep.subr.mxu0 0.0
  %1583 = vmatpush1.msra.mxu0 %v1564
  %1584 = vmatprep.subr.mxu0 0.0
  %1585 = vmatpush1.msra.mxu0 %v1565
  %1586 = vmatprep.subr.mxu0 0.0
  %1587 = vmatpush1.msra.mxu0 %v1566
  %1588 = vmatprep.subr.mxu0 0.0
  %1589 = vmatpush1.msra.mxu0 %v1567
  %1590 = vmatprep.subr.mxu0 0.0
  %1591 = vmatpush1.msra.mxu0 %v1568
  %1592 = vmatprep.subr.mxu0 0.0
  %1593 = vmatpush1.msra.mxu0 %v1569
  %1594 = vmatprep.subr.mxu0 0.0
  %1595 = vmatpush1.msra.mxu0 %v1570
  %1596 = vmatprep.subr.mxu0 0.0
  %1597 = vmatpush1.msra.mxu0 %v1571
  %1598 = vmatprep.subr.mxu0 0.0
  %1599 = vmatpush1.msra.mxu0 0.0
  %1600 = vmatprep.subr.mxu0 0.0
  %1601 = vmatpush1.msra.mxu0 0.0
  %1602 = vmatprep.subr.mxu0 0.0
  %1603 = vmatpush1.msra.mxu0 0.0
  %1604 = vmatprep.subr.mxu0 0.0
  %1605 = vmatpush1.msra.mxu0 0.0
  %1606 = vmatprep.subr.mxu0 0.0
  %1607 = vmatpush1.msra.mxu0 0.0
  %1608 = vmatprep.subr.mxu0 0.0
  %1609 = vmatpush1.msra.mxu0 0.0
  %1610 = vmatprep.subr.mxu0 0.0
  %1611 = vmatpush1.msra.mxu0 0.0
  %1612 = vmatprep.subr.mxu0 0.0
  %1613 = vmatpush1.msra.mxu0 0.0
  %1614 = vmatprep.subr.mxu0 0.0
  %1615 = vmatpush1.msra.mxu0 0.0
  %1616 = vmatprep.subr.mxu0 0.0
  %1617 = vmatpush1.msra.mxu0 0.0
  %1618 = vmatprep.subr.mxu0 0.0
  %1619 = vmatpush1.msra.mxu0 0.0
  %1620 = vmatprep.subr.mxu0 0.0
  %1621 = vmatpush1.msra.mxu0 0.0
  %1622 = vmatprep.subr.mxu0 0.0
  %1623 = vmatpush1.msra.mxu0 0.0
  %1624 = vmatprep.subr.mxu0 0.0
  %1625 = vmatpush1.msra.mxu0 0.0
  %1626 = vmatprep.subr.mxu0 0.0
  %1627 = vmatpush1.msra.mxu0 0.0
  %1628 = vmatprep.subr.mxu0 0.0
  %1629 = vmatpush1.msra.mxu0 0.0
  %1630 = vmatprep.subr.mxu0 0.0
  %1631 = vmatpush1.msra.mxu0 0.0
  %1632 = vmatprep.subr.mxu0 0.0
  %1633 = vmatpush1.msra.mxu0 0.0
  %1634 = vmatprep.subr.mxu0 0.0
  %1635 = vmatpush1.msra.mxu0 0.0
  %1636 = vmatprep.subr.mxu0 0.0
  %1637 = vmatpush1.msra.mxu0 0.0
  %1638 = vmatprep.subr.mxu0 0.0
  %1639 = vmatpush1.msra.mxu0 0.0
  %1640 = vmatprep.subr.mxu0 0.0
  %1641 = vmatpush1.msra.mxu0 0.0
  %1642 = vmatprep.subr.mxu0 0.0
  %1643 = vmatpush1.msra.mxu0 0.0
  %1644 = vmatprep.subr.mxu0 0.0
  %1645 = vmatpush1.msra.mxu0 0.0
  %1646 = vmatprep.mubr.f32.mxu0 0.0
  %1647 = vmatmul.mubr.f32.gmra.mrb[0].mxu0 %v1580
  %v1648 = vpop.f32.mrb[0].mxu0
  %v1649 = vadd.f32 %v1577, %v1648
  %v1650 = vpop.f32.mrb[0].mxu0
  %1651 = vdwg.mxu0
  %1652 = vst [vmem:[%s9] sm:$0xff] %v1649
  // Predicated region
  $region38: #{forward.1} parent=0 // pred_check
    _
  $region39: #{forward.1} parent=0 // pred_check_branch
    %1654 = sbr.rel (0) target = $region41
  $region40: #{forward.1} parent=0 // pred_region
    _
  $region41: #{forward.1} parent=0 // pred_fallthru
    _
  // Predicated region
  $region42: #{forward.1} parent=0 // pred_check
    _
  $region43: #{forward.1} parent=0 // pred_check_branch
    %1656 = sbr.rel (0) target = $region45
  $region44: #{forward.1} parent=0 // pred_region
    _
  $region45: #{forward.1} parent=0 // pred_fallthru
    _

</llo_original>
